<compile_context>
chip_gen: v7x
topology: tpu7x:2x2x1
jax: 0.10.0
libtpu: 0.0.40
codegen_flags: <defaults>
</compile_context>

<pallas_src>
import math
import functools

import jax
import jax.numpy as jnp
from jax.experimental import pallas as pl
from jax.experimental.pallas import tpu as pltpu


# ----------------------------- in-kernel helpers -----------------------------

def _layernorm(x, w, b, eps=1e-5):
    # x: (N, D) f32, w/b: (1, D) f32.  PyTorch LayerNorm: biased var, eps=1e-5.
    mu = jnp.mean(x, axis=-1, keepdims=True)
    xc = x - mu
    var = jnp.mean(xc * xc, axis=-1, keepdims=True)
    return xc * jax.lax.rsqrt(var + eps) * w + b


def _new_gelu(x):
    c = math.sqrt(2.0 / math.pi)
    return 0.5 * x * (1.0 + jnp.tanh(c * (x + 0.044715 * x * x * x)))


# ----------------------------- transformer block kernel ----------------------

def _block_kernel(x_ref,
                  ln1w_ref, ln1b_ref,
                  qkvw_ref, qkvb_ref,
                  outw_ref, outb_ref,
                  ln2w_ref, ln2b_ref,
                  fcw_ref, fcb_ref,
                  projw_ref, projb_ref,
                  o_ref,
                  *, n_head):
    Bg, T, D = x_ref.shape
    hd = D // n_head
    scale = 1.0 / math.sqrt(hd)
    bf16 = jnp.bfloat16

    x = x_ref[...].reshape(Bg * T, D)                       # (N, D) f32

    # --- attention branch: x + out_proj(attn(ln_1(x))) ---
    h = _layernorm(x, ln1w_ref[...], ln1b_ref[...])
    qkv = jnp.dot(h.astype(bf16), qkvw_ref[...],
                  preferred_element_type=jnp.float32) + qkvb_ref[...]   # (N, 3D)
    # Fold the attention scale into q once (f32), then cast q/k/v to bf16 once.
    q = (qkv[:, 0 * D:1 * D] * scale).astype(bf16)
    k = qkv[:, 1 * D:2 * D].astype(bf16)
    v = qkv[:, 2 * D:3 * D].astype(bf16)

    y_heads = []
    for hh in range(n_head):                                # short static loop
        sl = slice(hh * hd, (hh + 1) * hd)
        qh = q[:, sl].reshape(Bg, T, hd)                    # (Bg, T, hd) bf16
        kh = k[:, sl].reshape(Bg, T, hd)
        vh = v[:, sl].reshape(Bg, T, hd)
        att = jnp.einsum('bqd,bkd->bqk', qh, kh,
                         preferred_element_type=jnp.float32)            # (Bg,T,T)
        att = att - jnp.max(att, axis=-1, keepdims=True)
        p = jnp.exp(att)
        p = p * pl.reciprocal(jnp.sum(p, axis=-1, keepdims=True), approx=True)
        yh = jnp.einsum('bqk,bkd->bqd', p.astype(bf16), vh,
                        preferred_element_type=jnp.float32)             # (Bg,T,hd)
        y_heads.append(yh.reshape(Bg * T, hd))
    y = jnp.concatenate(y_heads, axis=-1)                               # (N, D)
    y = jnp.dot(y.astype(bf16), outw_ref[...],
                preferred_element_type=jnp.float32) + outb_ref[...]
    x = x + y

    # --- MLP branch: x + c_proj(gelu(c_fc(ln_2(x)))) ---
    h2 = _layernorm(x, ln2w_ref[...], ln2b_ref[...])
    z = jnp.dot(h2.astype(bf16), fcw_ref[...],
                preferred_element_type=jnp.float32) + fcb_ref[...]
    z = _new_gelu(z)
    z = jnp.dot(z.astype(bf16), projw_ref[...],
                preferred_element_type=jnp.float32) + projb_ref[...]
    x = x + z

    o_ref[...] = x.reshape(Bg, T, D)


_PARAM_ORDER = ("ln1_w", "ln1_b", "qkv_w", "qkv_b", "out_w", "out_b",
                "ln2_w", "ln2_b", "fc_w", "fc_b", "proj_w", "proj_b")


def block_forward(x, params, n_head, batch_block=None):
    """x: (B, T, D) f32.  Returns (y, 0.0, 0) mirroring the PyTorch tuple."""
    B, T, D = x.shape
    if batch_block is None:
        batch_block = B    # whole batch per grid step; use B//2 on v7x (2 TCs)
    assert B % batch_block == 0
    grid = (B // batch_block,)

    x_spec = pl.BlockSpec((batch_block, T, D), lambda i: (i, 0, 0))
    w_specs = [pl.BlockSpec(params[name].shape, lambda i: (0, 0))
               for name in _PARAM_ORDER]

    kernel = functools.partial(_block_kernel, n_head=n_head)
    y = pl.pallas_call(
        kernel,
        out_shape=jax.ShapeDtypeStruct((B, T, D), jnp.float32),
        grid=grid,
        in_specs=[x_spec] + w_specs,
        out_specs=x_spec,
        compiler_params=pltpu.CompilerParams(
            dimension_semantics=("parallel",),
            vmem_limit_bytes=32 * 1024 * 1024),
    )(x, *(params[name] for name in _PARAM_ORDER))
    return y, 0.0, 0


# ----------------------------- params & pure-JAX reference -------------------

def init_block_params(key, n_embd):
    D = n_embd
    std = 0.02
    ks = jax.random.split(key, 8)
    nrm = lambda kk, shape: std * jax.random.normal(kk, shape, dtype=jnp.float32)
    return {
        "ln1_w": jnp.ones((1, D), jnp.float32),
        "ln1_b": jnp.zeros((1, D), jnp.float32),
        "qkv_w": nrm(ks[0], (D, 3 * D)).astype(jnp.bfloat16),
        "qkv_b": nrm(ks[1], (1, 3 * D)),
        "out_w": nrm(ks[2], (D, D)).astype(jnp.bfloat16),
        "out_b": nrm(ks[3], (1, D)),
        "ln2_w": jnp.ones((1, D), jnp.float32),
        "ln2_b": jnp.zeros((1, D), jnp.float32),
        "fc_w": nrm(ks[4], (D, 4 * D)).astype(jnp.bfloat16),
        "fc_b": nrm(ks[5], (1, 4 * D)),
        "proj_w": nrm(ks[6], (4 * D, D)).astype(jnp.bfloat16),
        "proj_b": nrm(ks[7], (1, D)),
    }


def _block_ref(x, params, n_head):
    """Pure-JAX f32 reference of the PyTorch Block forward (eval mode)."""
    B, T, D = x.shape
    hd = D // n_head
    f32 = lambda a: a.astype(jnp.float32)

    def ln(t, w, b):
        mu = t.mean(-1, keepdims=True)
        var = ((t - mu) ** 2).mean(-1, keepdims=True)
        return (t - mu) / jnp.sqrt(var + 1e-5) * w + b

    h = ln(x, f32(params["ln1_w"]), f32(params["ln1_b"]))
    qkv = h @ f32(params["qkv_w"]) + f32(params["qkv_b"])
    q, k, v = jnp.split(qkv, 3, axis=-1)
    q = q.reshape(B, T, n_head, hd).transpose(0, 2, 1, 3)
    k = k.reshape(B, T, n_head, hd).transpose(0, 2, 1, 3)
    v = v.reshape(B, T, n_head, hd).transpose(0, 2, 1, 3)
    att = jnp.einsum('bhqd,bhkd->bhqk', q, k) / math.sqrt(hd)
    att = jax.nn.softmax(att, axis=-1)
    y = jnp.einsum('bhqk,bhkd->bhqd', att, v)
    y = y.transpose(0, 2, 1, 3).reshape(B, T, D)
    y = y @ f32(params["out_w"]) + f32(params["out_b"])
    x = x + y
    h2 = ln(x, f32(params["ln2_w"]), f32(params["ln2_b"]))
    z = h2 @ f32(params["fc_w"]) + f32(params["fc_b"])
    c = math.sqrt(2.0 / math.pi)
    z = 0.5 * z * (1.0 + jnp.tanh(c * (z + 0.044715 * z * z * z)))
    z = z @ f32(params["proj_w"]) + f32(params["proj_b"])
    return x + z


# ----------------------------- main -------------------------------------------

if __name__ == "__main__":
    B, T, D, n_head = 2, 8, 32, 4

    key = jax.random.PRNGKey(0)
    pkey, xkey = jax.random.split(key)
    params = init_block_params(pkey, D)
    x = jax.random.normal(xkey, (B, T, D), dtype=jnp.float32)

    y, _dt, _dmem = block_forward(x, params, n_head)
    y = jax.block_until_ready(y)

    assert y.shape == (B, T, D)
    assert bool(jnp.all(jnp.isfinite(y)))

    # loose tolerance: kernel uses bf16 MXU operands + approx reciprocal
    y_ref = _block_ref(x, params, n_head)
    assert bool(jnp.allclose(y, y_ref, rtol=5e-2, atol=5e-2)), float(
        jnp.max(jnp.abs(y - y_ref)))

    print("KERNEL_OK")
</pallas_src>

<mosaic_0001>
module attributes {stable_mosaic.version = 11 : i64} {
  func.func @_block_kernel(%arg0: i32, %arg1: memref<2x8x32xf32, #tpu.memory_space<vmem>>, %arg2: memref<1x32xf32, #tpu.memory_space<vmem>>, %arg3: memref<1x32xf32, #tpu.memory_space<vmem>>, %arg4: memref<32x96xbf16, #tpu.memory_space<vmem>>, %arg5: memref<1x96xf32, #tpu.memory_space<vmem>>, %arg6: memref<32x32xbf16, #tpu.memory_space<vmem>>, %arg7: memref<1x32xf32, #tpu.memory_space<vmem>>, %arg8: memref<1x32xf32, #tpu.memory_space<vmem>>, %arg9: memref<1x32xf32, #tpu.memory_space<vmem>>, %arg10: memref<32x128xbf16, #tpu.memory_space<vmem>>, %arg11: memref<1x128xf32, #tpu.memory_space<vmem>>, %arg12: memref<128x32xbf16, #tpu.memory_space<vmem>>, %arg13: memref<1x32xf32, #tpu.memory_space<vmem>>, %arg14: memref<2x8x32xf32, #tpu.memory_space<vmem>>) attributes {dimension_semantics = [#tpu.dimension_semantics<parallel>], iteration_bounds = array<i64: 1>, scalar_prefetch = 0 : i64, scratch_operands = 0 : i64, tpu.core_type = #tpu.core_type<tc>, window_params = [{transform_indices = @transform_0, window_bounds = array<i64: 2, 8, 32>}, {pipeline_mode = #tpu.pipeline_mode<synchronous>, transform_indices = @transform_1, window_bounds = array<i64: 1, 32>}, {pipeline_mode = #tpu.pipeline_mode<synchronous>, transform_indices = @transform_2, window_bounds = array<i64: 1, 32>}, {pipeline_mode = #tpu.pipeline_mode<synchronous>, transform_indices = @transform_3, window_bounds = array<i64: 32, 96>}, {pipeline_mode = #tpu.pipeline_mode<synchronous>, transform_indices = @transform_4, window_bounds = array<i64: 1, 96>}, {pipeline_mode = #tpu.pipeline_mode<synchronous>, transform_indices = @transform_5, window_bounds = array<i64: 32, 32>}, {pipeline_mode = #tpu.pipeline_mode<synchronous>, transform_indices = @transform_6, window_bounds = array<i64: 1, 32>}, {pipeline_mode = #tpu.pipeline_mode<synchronous>, transform_indices = @transform_7, window_bounds = array<i64: 1, 32>}, {pipeline_mode = #tpu.pipeline_mode<synchronous>, transform_indices = @transform_8, window_bounds = array<i64: 1, 32>}, {pipeline_mode = #tpu.pipeline_mode<synchronous>, transform_indices = @transform_9, window_bounds = array<i64: 32, 128>}, {pipeline_mode = #tpu.pipeline_mode<synchronous>, transform_indices = @transform_10, window_bounds = array<i64: 1, 128>}, {pipeline_mode = #tpu.pipeline_mode<synchronous>, transform_indices = @transform_11, window_bounds = array<i64: 128, 32>}, {pipeline_mode = #tpu.pipeline_mode<synchronous>, transform_indices = @transform_12, window_bounds = array<i64: 1, 32>}, {transform_indices = @transform_13, window_bounds = array<i64: 2, 8, 32>}]} {
    %c0 = arith.constant 0 : index
    %c0_0 = arith.constant 0 : index
    %c0_1 = arith.constant 0 : index
    %0 = vector.load %arg1[%c0, %c0_0, %c0_1] : memref<2x8x32xf32, #tpu.memory_space<vmem>>, vector<2x8x32xf32>
    %1 = vector.shape_cast %0 : vector<2x8x32xf32> to vector<16x32xf32>
    %c0_2 = arith.constant 0 : index
    %c0_3 = arith.constant 0 : index
    %2 = vector.load %arg2[%c0_2, %c0_3] : memref<1x32xf32, #tpu.memory_space<vmem>>, vector<1x32xf32>
    %c0_4 = arith.constant 0 : index
    %c0_5 = arith.constant 0 : index
    %3 = vector.load %arg3[%c0_4, %c0_5] : memref<1x32xf32, #tpu.memory_space<vmem>>, vector<1x32xf32>
    %cst = arith.constant dense<0.000000e+00> : vector<16xf32>
    %4 = vector.multi_reduction <add>, %1, %cst [1] : vector<16x32xf32> to vector<16xf32>
    %5 = vector.shape_cast %4 : vector<16xf32> to vector<16x1xf32>
    %cst_6 = arith.constant 3.200000e+01 : f32
    %6 = vector.broadcast %cst_6 : f32 to vector<16x1xf32>
    %7 = arith.divf %5, %6 : vector<16x1xf32>
    %8 = vector.broadcast %7 : vector<16x1xf32> to vector<16x32xf32>
    %9 = arith.subf %1, %8 : vector<16x32xf32>
    %10 = arith.mulf %9, %9 : vector<16x32xf32>
    %cst_7 = arith.constant dense<0.000000e+00> : vector<16xf32>
    %11 = vector.multi_reduction <add>, %10, %cst_7 [1] : vector<16x32xf32> to vector<16xf32>
    %12 = vector.shape_cast %11 : vector<16xf32> to vector<16x1xf32>
    %cst_8 = arith.constant 3.200000e+01 : f32
    %13 = vector.broadcast %cst_8 : f32 to vector<16x1xf32>
    %14 = arith.divf %12, %13 : vector<16x1xf32>
    %cst_9 = arith.constant 9.99999974E-6 : f32
    %15 = vector.broadcast %cst_9 : f32 to vector<16x1xf32>
    %16 = arith.addf %14, %15 : vector<16x1xf32>
    %17 = math.rsqrt %16 : vector<16x1xf32>
    %18 = vector.broadcast %17 : vector<16x1xf32> to vector<16x32xf32>
    %19 = arith.mulf %9, %18 : vector<16x32xf32>
    %20 = vector.broadcast %2 : vector<1x32xf32> to vector<16x32xf32>
    %21 = arith.mulf %19, %20 : vector<16x32xf32>
    %22 = vector.broadcast %3 : vector<1x32xf32> to vector<16x32xf32>
    %23 = arith.addf %21, %22 : vector<16x32xf32>
    %24 = arith.truncf %23 : vector<16x32xf32> to vector<16x32xbf16>
    %c0_10 = arith.constant 0 : index
    %c0_11 = arith.constant 0 : index
    %25 = vector.load %arg4[%c0_10, %c0_11] : memref<32x96xbf16, #tpu.memory_space<vmem>>, vector<32x96xbf16>
    %cst_12 = arith.constant dense<0.000000e+00> : vector<16x96xf32>
    %26 = tpu.matmul %24, %25, %cst_12 {dimension_numbers = #tpu.dot_dimension_numbers<[1], [0], [0], [1], [0, 0, 1, 1], [], []>} : vector<16x32xbf16>, vector<32x96xbf16>, vector<16x96xf32> -> vector<16x96xf32>
    %c0_13 = arith.constant 0 : index
    %c0_14 = arith.constant 0 : index
    %27 = vector.load %arg5[%c0_13, %c0_14] : memref<1x96xf32, #tpu.memory_space<vmem>>, vector<1x96xf32>
    %28 = vector.broadcast %27 : vector<1x96xf32> to vector<16x96xf32>
    %29 = arith.addf %26, %28 : vector<16x96xf32>
    %30 = vector.extract_strided_slice %29 {offsets = [0, 0], sizes = [16, 32], strides = [1, 1]} : vector<16x96xf32> to vector<16x32xf32>
    %cst_15 = arith.constant 0.353553385 : f32
    %31 = vector.broadcast %cst_15 : f32 to vector<16x32xf32>
    %32 = arith.mulf %30, %31 : vector<16x32xf32>
    %33 = arith.truncf %32 : vector<16x32xf32> to vector<16x32xbf16>
    %34 = vector.extract_strided_slice %29 {offsets = [0, 32], sizes = [16, 32], strides = [1, 1]} : vector<16x96xf32> to vector<16x32xf32>
    %35 = arith.truncf %34 : vector<16x32xf32> to vector<16x32xbf16>
    %36 = vector.extract_strided_slice %29 {offsets = [0, 64], sizes = [16, 32], strides = [1, 1]} : vector<16x96xf32> to vector<16x32xf32>
    %37 = arith.truncf %36 : vector<16x32xf32> to vector<16x32xbf16>
    %38 = vector.extract_strided_slice %33 {offsets = [0, 0], sizes = [16, 8], strides = [1, 1]} : vector<16x32xbf16> to vector<16x8xbf16>
    %39 = vector.shape_cast %38 : vector<16x8xbf16> to vector<2x8x8xbf16>
    %40 = vector.extract_strided_slice %35 {offsets = [0, 0], sizes = [16, 8], strides = [1, 1]} : vector<16x32xbf16> to vector<16x8xbf16>
    %41 = vector.shape_cast %40 : vector<16x8xbf16> to vector<2x8x8xbf16>
    %42 = vector.extract_strided_slice %37 {offsets = [0, 0], sizes = [16, 8], strides = [1, 1]} : vector<16x32xbf16> to vector<16x8xbf16>
    %43 = vector.shape_cast %42 : vector<16x8xbf16> to vector<2x8x8xbf16>
    "tpu.trace_start"() <{level = 10 : i32, message = "bqd,bkd->bqk"}> : () -> ()
    %cst_16 = arith.constant dense<0.000000e+00> : vector<2x8x8xf32>
    %44 = tpu.matmul %39, %41, %cst_16 {dimension_numbers = #tpu.dot_dimension_numbers<[2], [2], [1], [1], [0, 0, 0, 1, 1, 1], [0], [0]>} : vector<2x8x8xbf16>, vector<2x8x8xbf16>, vector<2x8x8xf32> -> vector<2x8x8xf32>
    "tpu.trace_stop"() : () -> ()
    %cst_17 = arith.constant dense<0xFF800000> : vector<2x8xf32>
    %45 = vector.multi_reduction <maximumf>, %44, %cst_17 [2] : vector<2x8x8xf32> to vector<2x8xf32>
    %46 = vector.shape_cast %45 : vector<2x8xf32> to vector<2x8x1xf32>
    %47 = vector.broadcast %46 : vector<2x8x1xf32> to vector<2x8x8xf32>
    %48 = arith.subf %44, %47 : vector<2x8x8xf32>
    %49 = math.exp %48 : vector<2x8x8xf32>
    %cst_18 = arith.constant dense<0.000000e+00> : vector<2x8xf32>
    %50 = vector.multi_reduction <add>, %49, %cst_18 [2] : vector<2x8x8xf32> to vector<2x8xf32>
    %51 = vector.shape_cast %50 : vector<2x8xf32> to vector<2x8x1xf32>
    %52 = tpu.reciprocal %51 {approx = true} : vector<2x8x1xf32> -> vector<2x8x1xf32>
    %53 = vector.broadcast %52 : vector<2x8x1xf32> to vector<2x8x8xf32>
    %54 = arith.mulf %49, %53 : vector<2x8x8xf32>
    %55 = arith.truncf %54 : vector<2x8x8xf32> to vector<2x8x8xbf16>
    "tpu.trace_start"() <{level = 10 : i32, message = "bqk,bkd->bqd"}> : () -> ()
    %cst_19 = arith.constant dense<0.000000e+00> : vector<2x8x8xf32>
    %56 = tpu.matmul %55, %43, %cst_19 {dimension_numbers = #tpu.dot_dimension_numbers<[2], [1], [1], [2], [0, 0, 0, 1, 1, 2], [0], [0]>} : vector<2x8x8xbf16>, vector<2x8x8xbf16>, vector<2x8x8xf32> -> vector<2x8x8xf32>
    "tpu.trace_stop"() : () -> ()
    %57 = vector.shape_cast %56 : vector<2x8x8xf32> to vector<16x8xf32>
    %58 = vector.extract_strided_slice %33 {offsets = [0, 8], sizes = [16, 8], strides = [1, 1]} : vector<16x32xbf16> to vector<16x8xbf16>
    %59 = vector.shape_cast %58 : vector<16x8xbf16> to vector<2x8x8xbf16>
    %60 = vector.extract_strided_slice %35 {offsets = [0, 8], sizes = [16, 8], strides = [1, 1]} : vector<16x32xbf16> to vector<16x8xbf16>
    %61 = vector.shape_cast %60 : vector<16x8xbf16> to vector<2x8x8xbf16>
    %62 = vector.extract_strided_slice %37 {offsets = [0, 8], sizes = [16, 8], strides = [1, 1]} : vector<16x32xbf16> to vector<16x8xbf16>
    %63 = vector.shape_cast %62 : vector<16x8xbf16> to vector<2x8x8xbf16>
    "tpu.trace_start"() <{level = 10 : i32, message = "bqd,bkd->bqk"}> : () -> ()
    %cst_20 = arith.constant dense<0.000000e+00> : vector<2x8x8xf32>
    %64 = tpu.matmul %59, %61, %cst_20 {dimension_numbers = #tpu.dot_dimension_numbers<[2], [2], [1], [1], [0, 0, 0, 1, 1, 1], [0], [0]>} : vector<2x8x8xbf16>, vector<2x8x8xbf16>, vector<2x8x8xf32> -> vector<2x8x8xf32>
    "tpu.trace_stop"() : () -> ()
    %cst_21 = arith.constant dense<0xFF800000> : vector<2x8xf32>
    %65 = vector.multi_reduction <maximumf>, %64, %cst_21 [2] : vector<2x8x8xf32> to vector<2x8xf32>
    %66 = vector.shape_cast %65 : vector<2x8xf32> to vector<2x8x1xf32>
    %67 = vector.broadcast %66 : vector<2x8x1xf32> to vector<2x8x8xf32>
    %68 = arith.subf %64, %67 : vector<2x8x8xf32>
    %69 = math.exp %68 : vector<2x8x8xf32>
    %cst_22 = arith.constant dense<0.000000e+00> : vector<2x8xf32>
    %70 = vector.multi_reduction <add>, %69, %cst_22 [2] : vector<2x8x8xf32> to vector<2x8xf32>
    %71 = vector.shape_cast %70 : vector<2x8xf32> to vector<2x8x1xf32>
    %72 = tpu.reciprocal %71 {approx = true} : vector<2x8x1xf32> -> vector<2x8x1xf32>
    %73 = vector.broadcast %72 : vector<2x8x1xf32> to vector<2x8x8xf32>
    %74 = arith.mulf %69, %73 : vector<2x8x8xf32>
    %75 = arith.truncf %74 : vector<2x8x8xf32> to vector<2x8x8xbf16>
    "tpu.trace_start"() <{level = 10 : i32, message = "bqk,bkd->bqd"}> : () -> ()
    %cst_23 = arith.constant dense<0.000000e+00> : vector<2x8x8xf32>
    %76 = tpu.matmul %75, %63, %cst_23 {dimension_numbers = #tpu.dot_dimension_numbers<[2], [1], [1], [2], [0, 0, 0, 1, 1, 2], [0], [0]>} : vector<2x8x8xbf16>, vector<2x8x8xbf16>, vector<2x8x8xf32> -> vector<2x8x8xf32>
    "tpu.trace_stop"() : () -> ()
    %77 = vector.shape_cast %76 : vector<2x8x8xf32> to vector<16x8xf32>
    %78 = vector.extract_strided_slice %33 {offsets = [0, 16], sizes = [16, 8], strides = [1, 1]} : vector<16x32xbf16> to vector<16x8xbf16>
    %79 = vector.shape_cast %78 : vector<16x8xbf16> to vector<2x8x8xbf16>
    %80 = vector.extract_strided_slice %35 {offsets = [0, 16], sizes = [16, 8], strides = [1, 1]} : vector<16x32xbf16> to vector<16x8xbf16>
    %81 = vector.shape_cast %80 : vector<16x8xbf16> to vector<2x8x8xbf16>
    %82 = vector.extract_strided_slice %37 {offsets = [0, 16], sizes = [16, 8], strides = [1, 1]} : vector<16x32xbf16> to vector<16x8xbf16>
    %83 = vector.shape_cast %82 : vector<16x8xbf16> to vector<2x8x8xbf16>
    "tpu.trace_start"() <{level = 10 : i32, message = "bqd,bkd->bqk"}> : () -> ()
    %cst_24 = arith.constant dense<0.000000e+00> : vector<2x8x8xf32>
    %84 = tpu.matmul %79, %81, %cst_24 {dimension_numbers = #tpu.dot_dimension_numbers<[2], [2], [1], [1], [0, 0, 0, 1, 1, 1], [0], [0]>} : vector<2x8x8xbf16>, vector<2x8x8xbf16>, vector<2x8x8xf32> -> vector<2x8x8xf32>
    "tpu.trace_stop"() : () -> ()
    %cst_25 = arith.constant dense<0xFF800000> : vector<2x8xf32>
    %85 = vector.multi_reduction <maximumf>, %84, %cst_25 [2] : vector<2x8x8xf32> to vector<2x8xf32>
    %86 = vector.shape_cast %85 : vector<2x8xf32> to vector<2x8x1xf32>
    %87 = vector.broadcast %86 : vector<2x8x1xf32> to vector<2x8x8xf32>
    %88 = arith.subf %84, %87 : vector<2x8x8xf32>
    %89 = math.exp %88 : vector<2x8x8xf32>
    %cst_26 = arith.constant dense<0.000000e+00> : vector<2x8xf32>
    %90 = vector.multi_reduction <add>, %89, %cst_26 [2] : vector<2x8x8xf32> to vector<2x8xf32>
    %91 = vector.shape_cast %90 : vector<2x8xf32> to vector<2x8x1xf32>
    %92 = tpu.reciprocal %91 {approx = true} : vector<2x8x1xf32> -> vector<2x8x1xf32>
    %93 = vector.broadcast %92 : vector<2x8x1xf32> to vector<2x8x8xf32>
    %94 = arith.mulf %89, %93 : vector<2x8x8xf32>
    %95 = arith.truncf %94 : vector<2x8x8xf32> to vector<2x8x8xbf16>
    "tpu.trace_start"() <{level = 10 : i32, message = "bqk,bkd->bqd"}> : () -> ()
    %cst_27 = arith.constant dense<0.000000e+00> : vector<2x8x8xf32>
    %96 = tpu.matmul %95, %83, %cst_27 {dimension_numbers = #tpu.dot_dimension_numbers<[2], [1], [1], [2], [0, 0, 0, 1, 1, 2], [0], [0]>} : vector<2x8x8xbf16>, vector<2x8x8xbf16>, vector<2x8x8xf32> -> vector<2x8x8xf32>
    "tpu.trace_stop"() : () -> ()
    %97 = vector.shape_cast %96 : vector<2x8x8xf32> to vector<16x8xf32>
    %98 = vector.extract_strided_slice %33 {offsets = [0, 24], sizes = [16, 8], strides = [1, 1]} : vector<16x32xbf16> to vector<16x8xbf16>
    %99 = vector.shape_cast %98 : vector<16x8xbf16> to vector<2x8x8xbf16>
    %100 = vector.extract_strided_slice %35 {offsets = [0, 24], sizes = [16, 8], strides = [1, 1]} : vector<16x32xbf16> to vector<16x8xbf16>
    %101 = vector.shape_cast %100 : vector<16x8xbf16> to vector<2x8x8xbf16>
    %102 = vector.extract_strided_slice %37 {offsets = [0, 24], sizes = [16, 8], strides = [1, 1]} : vector<16x32xbf16> to vector<16x8xbf16>
    %103 = vector.shape_cast %102 : vector<16x8xbf16> to vector<2x8x8xbf16>
    "tpu.trace_start"() <{level = 10 : i32, message = "bqd,bkd->bqk"}> : () -> ()
    %cst_28 = arith.constant dense<0.000000e+00> : vector<2x8x8xf32>
    %104 = tpu.matmul %99, %101, %cst_28 {dimension_numbers = #tpu.dot_dimension_numbers<[2], [2], [1], [1], [0, 0, 0, 1, 1, 1], [0], [0]>} : vector<2x8x8xbf16>, vector<2x8x8xbf16>, vector<2x8x8xf32> -> vector<2x8x8xf32>
    "tpu.trace_stop"() : () -> ()
    %cst_29 = arith.constant dense<0xFF800000> : vector<2x8xf32>
    %105 = vector.multi_reduction <maximumf>, %104, %cst_29 [2] : vector<2x8x8xf32> to vector<2x8xf32>
    %106 = vector.shape_cast %105 : vector<2x8xf32> to vector<2x8x1xf32>
    %107 = vector.broadcast %106 : vector<2x8x1xf32> to vector<2x8x8xf32>
    %108 = arith.subf %104, %107 : vector<2x8x8xf32>
    %109 = math.exp %108 : vector<2x8x8xf32>
    %cst_30 = arith.constant dense<0.000000e+00> : vector<2x8xf32>
    %110 = vector.multi_reduction <add>, %109, %cst_30 [2] : vector<2x8x8xf32> to vector<2x8xf32>
    %111 = vector.shape_cast %110 : vector<2x8xf32> to vector<2x8x1xf32>
    %112 = tpu.reciprocal %111 {approx = true} : vector<2x8x1xf32> -> vector<2x8x1xf32>
    %113 = vector.broadcast %112 : vector<2x8x1xf32> to vector<2x8x8xf32>
    %114 = arith.mulf %109, %113 : vector<2x8x8xf32>
    %115 = arith.truncf %114 : vector<2x8x8xf32> to vector<2x8x8xbf16>
    "tpu.trace_start"() <{level = 10 : i32, message = "bqk,bkd->bqd"}> : () -> ()
    %cst_31 = arith.constant dense<0.000000e+00> : vector<2x8x8xf32>
    %116 = tpu.matmul %115, %103, %cst_31 {dimension_numbers = #tpu.dot_dimension_numbers<[2], [1], [1], [2], [0, 0, 0, 1, 1, 2], [0], [0]>} : vector<2x8x8xbf16>, vector<2x8x8xbf16>, vector<2x8x8xf32> -> vector<2x8x8xf32>
    "tpu.trace_stop"() : () -> ()
    %117 = vector.shape_cast %116 : vector<2x8x8xf32> to vector<16x8xf32>
    %118 = tpu.concatenate %57, %77, %97, %117 in 1 : vector<16x8xf32>, vector<16x8xf32>, vector<16x8xf32>, vector<16x8xf32> -> vector<16x32xf32>
    %119 = arith.truncf %118 : vector<16x32xf32> to vector<16x32xbf16>
    %c0_32 = arith.constant 0 : index
    %c0_33 = arith.constant 0 : index
    %120 = vector.load %arg6[%c0_32, %c0_33] : memref<32x32xbf16, #tpu.memory_space<vmem>>, vector<32x32xbf16>
    %cst_34 = arith.constant dense<0.000000e+00> : vector<16x32xf32>
    %121 = tpu.matmul %119, %120, %cst_34 {dimension_numbers = #tpu.dot_dimension_numbers<[1], [0], [0], [1], [0, 0, 1, 1], [], []>} : vector<16x32xbf16>, vector<32x32xbf16>, vector<16x32xf32> -> vector<16x32xf32>
    %c0_35 = arith.constant 0 : index
    %c0_36 = arith.constant 0 : index
    %122 = vector.load %arg7[%c0_35, %c0_36] : memref<1x32xf32, #tpu.memory_space<vmem>>, vector<1x32xf32>
    %123 = vector.broadcast %122 : vector<1x32xf32> to vector<16x32xf32>
    %124 = arith.addf %121, %123 : vector<16x32xf32>
    %125 = arith.addf %1, %124 : vector<16x32xf32>
    %c0_37 = arith.constant 0 : index
    %c0_38 = arith.constant 0 : index
    %126 = vector.load %arg8[%c0_37, %c0_38] : memref<1x32xf32, #tpu.memory_space<vmem>>, vector<1x32xf32>
    %c0_39 = arith.constant 0 : index
    %c0_40 = arith.constant 0 : index
    %127 = vector.load %arg9[%c0_39, %c0_40] : memref<1x32xf32, #tpu.memory_space<vmem>>, vector<1x32xf32>
    %cst_41 = arith.constant dense<0.000000e+00> : vector<16xf32>
    %128 = vector.multi_reduction <add>, %125, %cst_41 [1] : vector<16x32xf32> to vector<16xf32>
    %129 = vector.shape_cast %128 : vector<16xf32> to vector<16x1xf32>
    %cst_42 = arith.constant 3.200000e+01 : f32
    %130 = vector.broadcast %cst_42 : f32 to vector<16x1xf32>
    %131 = arith.divf %129, %130 : vector<16x1xf32>
    %132 = vector.broadcast %131 : vector<16x1xf32> to vector<16x32xf32>
    %133 = arith.subf %125, %132 : vector<16x32xf32>
    %134 = arith.mulf %133, %133 : vector<16x32xf32>
    %cst_43 = arith.constant dense<0.000000e+00> : vector<16xf32>
    %135 = vector.multi_reduction <add>, %134, %cst_43 [1] : vector<16x32xf32> to vector<16xf32>
    %136 = vector.shape_cast %135 : vector<16xf32> to vector<16x1xf32>
    %cst_44 = arith.constant 3.200000e+01 : f32
    %137 = vector.broadcast %cst_44 : f32 to vector<16x1xf32>
    %138 = arith.divf %136, %137 : vector<16x1xf32>
    %cst_45 = arith.constant 9.99999974E-6 : f32
    %139 = vector.broadcast %cst_45 : f32 to vector<16x1xf32>
    %140 = arith.addf %138, %139 : vector<16x1xf32>
    %141 = math.rsqrt %140 : vector<16x1xf32>
    %142 = vector.broadcast %141 : vector<16x1xf32> to vector<16x32xf32>
    %143 = arith.mulf %133, %142 : vector<16x32xf32>
    %144 = vector.broadcast %126 : vector<1x32xf32> to vector<16x32xf32>
    %145 = arith.mulf %143, %144 : vector<16x32xf32>
    %146 = vector.broadcast %127 : vector<1x32xf32> to vector<16x32xf32>
    %147 = arith.addf %145, %146 : vector<16x32xf32>
    %148 = arith.truncf %147 : vector<16x32xf32> to vector<16x32xbf16>
    %c0_46 = arith.constant 0 : index
    %c0_47 = arith.constant 0 : index
    %149 = vector.load %arg10[%c0_46, %c0_47] : memref<32x128xbf16, #tpu.memory_space<vmem>>, vector<32x128xbf16>
    %cst_48 = arith.constant dense<0.000000e+00> : vector<16x128xf32>
    %150 = tpu.matmul %148, %149, %cst_48 {dimension_numbers = #tpu.dot_dimension_numbers<[1], [0], [0], [1], [0, 0, 1, 1], [], []>} : vector<16x32xbf16>, vector<32x128xbf16>, vector<16x128xf32> -> vector<16x128xf32>
    %c0_49 = arith.constant 0 : index
    %c0_50 = arith.constant 0 : index
    %151 = vector.load %arg11[%c0_49, %c0_50] : memref<1x128xf32, #tpu.memory_space<vmem>>, vector<1x128xf32>
    %152 = vector.broadcast %151 : vector<1x128xf32> to vector<16x128xf32>
    %153 = arith.addf %150, %152 : vector<16x128xf32>
    %cst_51 = arith.constant 5.000000e-01 : f32
    %154 = vector.broadcast %cst_51 : f32 to vector<16x128xf32>
    %155 = arith.mulf %154, %153 : vector<16x128xf32>
    %cst_52 = arith.constant 4.471500e-02 : f32
    %156 = vector.broadcast %cst_52 : f32 to vector<16x128xf32>
    %157 = arith.mulf %156, %153 : vector<16x128xf32>
    %158 = arith.mulf %157, %153 : vector<16x128xf32>
    %159 = arith.mulf %158, %153 : vector<16x128xf32>
    %160 = arith.addf %153, %159 : vector<16x128xf32>
    %cst_53 = arith.constant 0.797884583 : f32
    %161 = vector.broadcast %cst_53 : f32 to vector<16x128xf32>
    %162 = arith.mulf %161, %160 : vector<16x128xf32>
    %163 = math.tanh %162 : vector<16x128xf32>
    %cst_54 = arith.constant 1.000000e+00 : f32
    %164 = vector.broadcast %cst_54 : f32 to vector<16x128xf32>
    %165 = arith.addf %164, %163 : vector<16x128xf32>
    %166 = arith.mulf %155, %165 : vector<16x128xf32>
    %167 = arith.truncf %166 : vector<16x128xf32> to vector<16x128xbf16>
    %c0_55 = arith.constant 0 : index
    %c0_56 = arith.constant 0 : index
    %168 = vector.load %arg12[%c0_55, %c0_56] : memref<128x32xbf16, #tpu.memory_space<vmem>>, vector<128x32xbf16>
    %cst_57 = arith.constant dense<0.000000e+00> : vector<16x32xf32>
    %169 = tpu.matmul %167, %168, %cst_57 {dimension_numbers = #tpu.dot_dimension_numbers<[1], [0], [0], [1], [0, 0, 1, 1], [], []>} : vector<16x128xbf16>, vector<128x32xbf16>, vector<16x32xf32> -> vector<16x32xf32>
    %c0_58 = arith.constant 0 : index
    %c0_59 = arith.constant 0 : index
    %170 = vector.load %arg13[%c0_58, %c0_59] : memref<1x32xf32, #tpu.memory_space<vmem>>, vector<1x32xf32>
    %171 = vector.broadcast %170 : vector<1x32xf32> to vector<16x32xf32>
    %172 = arith.addf %169, %171 : vector<16x32xf32>
    %173 = arith.addf %125, %172 : vector<16x32xf32>
    %174 = vector.shape_cast %173 : vector<16x32xf32> to vector<2x8x32xf32>
    %c0_60 = arith.constant 0 : index
    %c0_61 = arith.constant 0 : index
    %c0_62 = arith.constant 0 : index
    %175 = vector.load %arg14[%c0_60, %c0_61, %c0_62] : memref<2x8x32xf32, #tpu.memory_space<vmem>>, vector<2x8x32xf32>
    tpu.vector_store %arg14[%c0_60, %c0_61, %c0_62], %174 {strides = array<i32>} : memref<2x8x32xf32, #tpu.memory_space<vmem>>, vector<2x8x32xf32>,
    return
  }
  func.func @transform_0(%arg0: i32) -> (i32, i32, i32) {
    %c0_i32 = arith.constant 0 : i32
    %c0_i32_0 = arith.constant 0 : i32
    %c0_i32_1 = arith.constant 0 : i32
    return %arg0, %c0_i32, %c0_i32_0 : i32, i32, i32
  }
  func.func @transform_1(%arg0: i32) -> (i32, i32) {
    %c0_i32 = arith.constant 0 : i32
    %c0_i32_0 = arith.constant 0 : i32
    %c0_i32_1 = arith.constant 0 : i32
    return %c0_i32, %c0_i32_0 : i32, i32
  }
  func.func @transform_2(%arg0: i32) -> (i32, i32) {
    %c0_i32 = arith.constant 0 : i32
    %c0_i32_0 = arith.constant 0 : i32
    %c0_i32_1 = arith.constant 0 : i32
    return %c0_i32, %c0_i32_0 : i32, i32
  }
  func.func @transform_3(%arg0: i32) -> (i32, i32) {
    %c0_i32 = arith.constant 0 : i32
    %c0_i32_0 = arith.constant 0 : i32
    %c0_i32_1 = arith.constant 0 : i32
    return %c0_i32, %c0_i32_0 : i32, i32
  }
  func.func @transform_4(%arg0: i32) -> (i32, i32) {
    %c0_i32 = arith.constant 0 : i32
    %c0_i32_0 = arith.constant 0 : i32
    %c0_i32_1 = arith.constant 0 : i32
    return %c0_i32, %c0_i32_0 : i32, i32
  }
  func.func @transform_5(%arg0: i32) -> (i32, i32) {
    %c0_i32 = arith.constant 0 : i32
    %c0_i32_0 = arith.constant 0 : i32
    %c0_i32_1 = arith.constant 0 : i32
    return %c0_i32, %c0_i32_0 : i32, i32
  }
  func.func @transform_6(%arg0: i32) -> (i32, i32) {
    %c0_i32 = arith.constant 0 : i32
    %c0_i32_0 = arith.constant 0 : i32
    %c0_i32_1 = arith.constant 0 : i32
    return %c0_i32, %c0_i32_0 : i32, i32
  }
  func.func @transform_7(%arg0: i32) -> (i32, i32) {
    %c0_i32 = arith.constant 0 : i32
    %c0_i32_0 = arith.constant 0 : i32
    %c0_i32_1 = arith.constant 0 : i32
    return %c0_i32, %c0_i32_0 : i32, i32
  }
  func.func @transform_8(%arg0: i32) -> (i32, i32) {
    %c0_i32 = arith.constant 0 : i32
    %c0_i32_0 = arith.constant 0 : i32
    %c0_i32_1 = arith.constant 0 : i32
    return %c0_i32, %c0_i32_0 : i32, i32
  }
  func.func @transform_9(%arg0: i32) -> (i32, i32) {
    %c0_i32 = arith.constant 0 : i32
    %c0_i32_0 = arith.constant 0 : i32
    %c0_i32_1 = arith.constant 0 : i32
    return %c0_i32, %c0_i32_0 : i32, i32
  }
  func.func @transform_10(%arg0: i32) -> (i32, i32) {
    %c0_i32 = arith.constant 0 : i32
    %c0_i32_0 = arith.constant 0 : i32
    %c0_i32_1 = arith.constant 0 : i32
    return %c0_i32, %c0_i32_0 : i32, i32
  }
  func.func @transform_11(%arg0: i32) -> (i32, i32) {
    %c0_i32 = arith.constant 0 : i32
    %c0_i32_0 = arith.constant 0 : i32
    %c0_i32_1 = arith.constant 0 : i32
    return %c0_i32, %c0_i32_0 : i32, i32
  }
  func.func @transform_12(%arg0: i32) -> (i32, i32) {
    %c0_i32 = arith.constant 0 : i32
    %c0_i32_0 = arith.constant 0 : i32
    %c0_i32_1 = arith.constant 0 : i32
    return %c0_i32, %c0_i32_0 : i32, i32
  }
  func.func @transform_13(%arg0: i32) -> (i32, i32, i32) {
    %c0_i32 = arith.constant 0 : i32
    %c0_i32_0 = arith.constant 0 : i32
    %c0_i32_1 = arith.constant 0 : i32
    return %arg0, %c0_i32, %c0_i32_0 : i32, i32, i32
  }
}

</mosaic_0001>

<llo_original>
// kernel: tpu_custom_call.1
$region0: #{tpu_custom_call.1}
  #allocation0 [shape = 'u32[]', space=smem, size = 0x4, offset = 0x4, fixed_abs, tag = 'smem constant byte address 0x4 - core index']
  #allocation1 [shape = 'u32[144,128]{1,0:T(1,128)}', space=vmem, size = 0x12000, scoped, tag = 'internal scratch']
  %s0 = inlined_call_operand.vmem [shape: f32[2,8,32], index: 0, kind: input, shape index: {}]
  %s1 = inlined_call_operand.vmem [shape: f32[1,32], index: 1, kind: input, shape index: {}]
  %s2 = inlined_call_operand.vmem [shape: f32[1,32], index: 2, kind: input, shape index: {}]
  %s3 = inlined_call_operand.vmem [shape: bf16[32,96], index: 3, kind: input, shape index: {}]
  %s4 = inlined_call_operand.vmem [shape: f32[1,96], index: 4, kind: input, shape index: {}]
  %s5 = inlined_call_operand.vmem [shape: bf16[32,32], index: 5, kind: input, shape index: {}]
  %s6 = inlined_call_operand.vmem [shape: f32[1,32], index: 6, kind: input, shape index: {}]
  %s7 = inlined_call_operand.vmem [shape: f32[1,32], index: 7, kind: input, shape index: {}]
  %s8 = inlined_call_operand.vmem [shape: f32[1,32], index: 8, kind: input, shape index: {}]
  %s9 = inlined_call_operand.vmem [shape: bf16[32,128], index: 9, kind: input, shape index: {}]
  %s10 = inlined_call_operand.vmem [shape: f32[1,128], index: 10, kind: input, shape index: {}]
  %s11 = inlined_call_operand.vmem [shape: bf16[128,32], index: 11, kind: input, shape index: {}]
  %s12 = inlined_call_operand.vmem [shape: f32[1,32], index: 12, kind: input, shape index: {}]
  %s13 = inlined_call_operand.hbm [shape: f32[2,8,32], index: 13, kind: output, shape index: {}]
  %s14 = sld [smem:[#allocation0]]
  $region62: #{tpu_custom_call.1} parent=0
    _
  %s16 = ssub.s32 1, %s14
  %s17 = scalar_select 0, %s16, %s14
  $region1: #{tpu_custom_call.1} parent=0
    #allocation2 [shape = 'u8[8192]{0}', space=vmem, size = 0x2000, scoped, tag = 'output window, operand 0, single buffered']
    #allocation3 [shape = 's32[1]{0}', space=sflag, size = 0x4, scoped, tag = 'scoped memory for tpu_custom_call.1']
    %18 = vsyncpa [#allocation3], 0
    // Predicated region
    $region2: #{tpu_custom_call.1} parent=1 // pred_check
      _
    $region3: #{tpu_custom_call.1} parent=1 // pred_check_branch
      %20 = sbr.rel (0) target = $region5
    $region4: #{tpu_custom_call.1} parent=1 // pred_region
      _
    $region5: #{tpu_custom_call.1} parent=1 // pred_fallthru
      _
    // Predicated region
    $region6: #{tpu_custom_call.1} parent=1 // pred_check
      _
    $region7: #{tpu_custom_call.1} parent=1 // pred_check_branch
      %22 = sbr.rel (0) target = $region9
    $region8: #{tpu_custom_call.1} parent=1 // pred_region
      _
    $region9: #{tpu_custom_call.1} parent=1 // pred_fallthru
      _
    // Predicated region
    $region10: #{tpu_custom_call.1} parent=1 // pred_check
      _
    $region11: #{tpu_custom_call.1} parent=1 // pred_check_branch
      %24 = sbr.rel (0) target = $region13
    $region12: #{tpu_custom_call.1} parent=1 // pred_region
      _
    $region13: #{tpu_custom_call.1} parent=1 // pred_fallthru
      _
    // Predicated region
    $region14: #{tpu_custom_call.1} parent=1 // pred_check
      _
    $region15: #{tpu_custom_call.1} parent=1 // pred_check_branch
      %26 = sbr.rel (0) target = $region17
    $region16: #{tpu_custom_call.1} parent=1 // pred_region
      _
    $region17: #{tpu_custom_call.1} parent=1 // pred_fallthru
      _
    // Predicated region
    $region18: #{tpu_custom_call.1} parent=1 // pred_check
      _
    $region19: #{tpu_custom_call.1} parent=1 // pred_check_branch
      %28 = sbr.rel (0) target = $region21
    $region20: #{tpu_custom_call.1} parent=1 // pred_region
      _
    $region21: #{tpu_custom_call.1} parent=1 // pred_fallthru
      _
    // Predicated region
    $region22: #{tpu_custom_call.1} parent=1 // pred_check
      _
    $region23: #{tpu_custom_call.1} parent=1 // pred_check_branch
      %30 = sbr.rel (0) target = $region25
    $region24: #{tpu_custom_call.1} parent=1 // pred_region
      _
    $region25: #{tpu_custom_call.1} parent=1 // pred_fallthru
      _
    // Predicated region
    $region26: #{tpu_custom_call.1} parent=1 // pred_check
      _
    $region27: #{tpu_custom_call.1} parent=1 // pred_check_branch
      %32 = sbr.rel (0) target = $region29
    $region28: #{tpu_custom_call.1} parent=1 // pred_region
      _
    $region29: #{tpu_custom_call.1} parent=1 // pred_fallthru
      _
    // Predicated region
    $region30: #{tpu_custom_call.1} parent=1 // pred_check
      _
    $region31: #{tpu_custom_call.1} parent=1 // pred_check_branch
      %34 = sbr.rel (0) target = $region33
    $region32: #{tpu_custom_call.1} parent=1 // pred_region
      _
    $region33: #{tpu_custom_call.1} parent=1 // pred_fallthru
      _
    // Predicated region
    $region34: #{tpu_custom_call.1} parent=1 // pred_check
      _
    $region35: #{tpu_custom_call.1} parent=1 // pred_check_branch
      %36 = sbr.rel (0) target = $region37
    $region36: #{tpu_custom_call.1} parent=1 // pred_region
      _
    $region37: #{tpu_custom_call.1} parent=1 // pred_fallthru
      _
    // Predicated region
    $region38: #{tpu_custom_call.1} parent=1 // pred_check
      _
    $region39: #{tpu_custom_call.1} parent=1 // pred_check_branch
      %38 = sbr.rel (0) target = $region41
    $region40: #{tpu_custom_call.1} parent=1 // pred_region
      _
    $region41: #{tpu_custom_call.1} parent=1 // pred_fallthru
      _
    // Predicated region
    $region42: #{tpu_custom_call.1} parent=1 // pred_check
      _
    $region43: #{tpu_custom_call.1} parent=1 // pred_check_branch
      %40 = sbr.rel (0) target = $region45
    $region44: #{tpu_custom_call.1} parent=1 // pred_region
      _
    $region45: #{tpu_custom_call.1} parent=1 // pred_fallthru
      _
    // Predicated region
    $region46: #{tpu_custom_call.1} parent=1 // pred_check
      _
    $region47: #{tpu_custom_call.1} parent=1 // pred_check_branch
      %42 = sbr.rel (0) target = $region49
    $region48: #{tpu_custom_call.1} parent=1 // pred_region
      _
    $region49: #{tpu_custom_call.1} parent=1 // pred_fallthru
      _
    // Predicated region
    $region50: #{tpu_custom_call.1} parent=1 // pred_check
      _
    $region51: #{tpu_custom_call.1} parent=1 // pred_check_branch
      %44 = sbr.rel (0) target = $region53
    $region52: #{tpu_custom_call.1} parent=1 // pred_region
      _
    $region53: #{tpu_custom_call.1} parent=1 // pred_fallthru
      _
    %v46 = vld [vmem:[%s0] sm:$0xff]
    %v47 = vld [vmem:[%s0 + $0x8] sm:$0xff]
    %v48 = vld [vmem:[%s1] sm:$0x1]
    %v49 = vld [vmem:[%s2] sm:$0x1]
    %vm50 = vcmask 261120
    %v51 = vsel %vm50, %v46, 0.0
    %52 = vadd.xlane.f32.xlu0 %v51
    %v53 = vpop.xlane.xlu0 %52
    %v54 = vsel %vm50, %v47, 0.0
    %55 = vadd.xlane.f32.xlu0 %v54
    %v56 = vpop.xlane.xlu0 %55
    %v57 = vrcp.pop 32.0
    %v58 = vmul.f32 %v53, %v57
    %v59 = vmul.f32 %v56, %v57
    %v60 = vsub.f32 %v46, %v58
    %v61 = vsub.f32 %v47, %v59
    %v62 = vmul.f32 %v60, %v60
    %v63 = vmul.f32 %v61, %v61
    %v64 = vsel %vm50, %v62, 0.0
    %65 = vadd.xlane.f32.xlu0 %v64
    %v66 = vpop.xlane.xlu0 %65
    %v67 = vsel %vm50, %v63, 0.0
    %68 = vadd.xlane.f32.xlu0 %v67
    %v69 = vpop.xlane.xlu0 %68
    %v70 = vmul.f32 %v66, %v57
    %v71 = vmul.f32 %v69, %v57
    %v72 = vadd.f32 %v70, 1e-05
    %v73 = vadd.f32 %v71, 1e-05
    %v74 = vrsqrt.pop %v72
    %v75 = vrsqrt.pop %v73
    %v76 = vmul.f32 %v60, %v74
    %v77 = vmul.f32 %v61, %v75
    %v79 = vlaneseq
    %v80 = vshrl.u32 %v79, 7
    %v81 = vsub.s32 0, %v80
    %v82 = vrot.slane %v48, %v81
    %v84 = vmul.f32 %v76, %v82
    %v85 = vmul.f32 %v77, %v82
    %v87 = vlaneseq
    %v88 = vshrl.u32 %v87, 7
    %v89 = vsub.s32 0, %v88
    %v90 = vrot.slane %v49, %v89
    %v92 = vadd.f32 %v84, %v90
    %v93 = vadd.f32 %v85, %v90
    %v94 = vpack.c.bf16 %v93, %v92
    %v95 = vld [vmem:[%s3] sm:$0xf]
    %v96 = vld [vmem:[%s3 + $0x4] sm:$0xf]
    %v97 = vld [vmem:[%s3 + $0x8] sm:$0xf]
    %v98 = vld [vmem:[%s3 + $0xc] sm:$0xf]
    %v99 = vld [vmem:[%s4] sm:$0x1]
    %v101 = vlaneseq
    %v102 = vshrl.u32 %v101, 7
    %v103 = vsub.s32 0, %v102
    %v104 = vrot.slane %v99, %v103
    %v110 = vunpack.c.l.b16 %v95
    %v111 = vunpack.c.l.b16 %v96
    %v112 = vunpack.c.l.b16 %v97
    %v113 = vunpack.c.l.b16 %v98
    %v114 = vpack.c.b16 %v111, %v110
    %v115 = vpack.c.b16 %v113, %v112
    %v119 = vsel %vm50, %v94, 0
    %121 = vmatprep.subr.bf16.mxu0 0
    %122 = vmatpush1.bf16.msra.mxu0 %v114
    %123 = vmatprep.subr.bf16.mxu0 0
    %124 = vmatpush1.bf16.msra.mxu0 %v115
    %125 = vmatprep.subr.bf16.mxu0 0
    %126 = vmatpush1.bf16.msra.mxu0 0
    %127 = vmatprep.subr.bf16.mxu0 0
    %128 = vmatpush1.bf16.msra.mxu0 0
    %129 = vmatprep.subr.bf16.mxu0 0
    %130 = vmatpush1.bf16.msra.mxu0 0
    %131 = vmatprep.subr.bf16.mxu0 0
    %132 = vmatpush1.bf16.msra.mxu0 0
    %133 = vmatprep.subr.bf16.mxu0 0
    %134 = vmatpush1.bf16.msra.mxu0 0
    %135 = vmatprep.subr.bf16.mxu0 0
    %136 = vmatpush1.bf16.msra.mxu0 0
    %137 = vmatprep.subr.bf16.mxu0 0
    %138 = vmatpush1.bf16.msra.mxu0 0
    %139 = vmatprep.subr.bf16.mxu0 0
    %140 = vmatpush1.bf16.msra.mxu0 0
    %141 = vmatprep.subr.bf16.mxu0 0
    %142 = vmatpush1.bf16.msra.mxu0 0
    %143 = vmatprep.subr.bf16.mxu0 0
    %144 = vmatpush1.bf16.msra.mxu0 0
    %145 = vmatprep.subr.bf16.mxu0 0
    %146 = vmatpush1.bf16.msra.mxu0 0
    %147 = vmatprep.subr.bf16.mxu0 0
    %148 = vmatpush1.bf16.msra.mxu0 0
    %149 = vmatprep.subr.bf16.mxu0 0
    %150 = vmatpush1.bf16.msra.mxu0 0
    %151 = vmatprep.subr.bf16.mxu0 0
    %152 = vmatpush1.bf16.msra.mxu0 0
    %153 = vmatprep.mubr.bf16.mxu0 0
    %154 = vmatmul.mubr.bf16.gmra.mrb[0].mxu0 %v119
    %v155 = vpop.f32.mrb[0].mxu0
    %v156 = vadd.f32 %v104, %v155
    %v157 = vpop.f32.mrb[0].mxu0
    %v158 = vpop.f32.mrb[0].mxu0
    %v159 = vadd.f32 %v104, %v158
    %v160 = vpop.f32.mrb[0].mxu0
    %161 = vdwg.mxu0
    %v162 = vmul.f32 %v156, 0.35355338
    %v163 = vmul.f32 %v159, 0.35355338
    %v164 = vpack.c.bf16 %v163, %v162
    %v165 = vpack.c.bf16 %v159, %v156
    %v167 = vunpack.c.l.b16 %v164
    %v168 = vunpack.c.h.b16 %v164
    %v169 = vpack.c.b16 %v167, %v167
    %v170 = vpack.c.b16 %v168, %v168
    %v172 = vunpack.c.l.b16 %v165
    %v173 = vunpack.c.h.b16 %v165
    %v174 = vpack.c.b16 %v172, %v172
    %175 = vrot.lane.b32.xlu0 %v174, 96
    %v176 = vpop.permute.xlu0 %175
    %vm177 = vcmask 64512
    %v179 = vsel %vm177, %v169, 0
    %v182 = vsel %vm177, %v176, 0
    %184 = vmatprep.subr.bf16.mxu0 0
    %185 = vmatpush1.bf16.xpose.msra.mxu0 %v182
    %186 = vmatprep.subr.bf16.mxu0 0
    %187 = vmatpush1.bf16.xpose.msra.mxu0 0
    %188 = vmatprep.subr.bf16.mxu0 0
    %189 = vmatpush1.bf16.xpose.msra.mxu0 0
    %190 = vmatprep.subr.bf16.mxu0 0
    %191 = vmatpush1.bf16.xpose.msra.mxu0 0
    %192 = vmatprep.subr.bf16.mxu0 0
    %193 = vmatpush1.bf16.xpose.msra.mxu0 0
    %194 = vmatprep.subr.bf16.mxu0 0
    %195 = vmatpush1.bf16.xpose.msra.mxu0 0
    %196 = vmatprep.subr.bf16.mxu0 0
    %197 = vmatpush1.bf16.xpose.msra.mxu0 0
    %198 = vmatprep.subr.bf16.mxu0 0
    %199 = vmatpush1.bf16.xpose.msra.mxu0 0
    %200 = vmatprep.subr.bf16.mxu0 0
    %201 = vmatpush1.bf16.xpose.msra.mxu0 0
    %202 = vmatprep.subr.bf16.mxu0 0
    %203 = vmatpush1.bf16.xpose.msra.mxu0 0
    %204 = vmatprep.subr.bf16.mxu0 0
    %205 = vmatpush1.bf16.xpose.msra.mxu0 0
    %206 = vmatprep.subr.bf16.mxu0 0
    %207 = vmatpush1.bf16.xpose.msra.mxu0 0
    %208 = vmatprep.subr.bf16.mxu0 0
    %209 = vmatpush1.bf16.xpose.msra.mxu0 0
    %210 = vmatprep.subr.bf16.mxu0 0
    %211 = vmatpush1.bf16.xpose.msra.mxu0 0
    %212 = vmatprep.subr.bf16.mxu0 0
    %213 = vmatpush1.bf16.xpose.msra.mxu0 0
    %214 = vmatprep.subr.bf16.mxu0 0
    %215 = vmatpush1.bf16.xpose.msra.mxu0 0
    %216 = vmatprep.mubr.bf16.mxu0 0
    %217 = vmatmul.mubr.bf16.gmra.mrb[0].mxu0 %v179
    %v218 = vpop.f32.mrb[0].mxu0
    %v219 = vadd.f32 0.0, %v218
    %v220 = vpop.f32.mrb[0].mxu0
    %v221 = vpop.f32.mrb[0].mxu0
    %v222 = vpop.f32.mrb[0].mxu0
    %223 = vdwg.mxu0
    %v224 = vpack.c.b16 %v173, %v173
    %225 = vrot.lane.b32.xlu0 %v224, 96
    %v226 = vpop.permute.xlu0 %225
    %v228 = vsel %vm177, %v170, 0
    %v231 = vsel %vm177, %v226, 0
    %233 = vmatprep.subr.bf16.mxu0 0
    %234 = vmatpush1.bf16.xpose.msra.mxu0 %v231
    %235 = vmatprep.subr.bf16.mxu0 0
    %236 = vmatpush1.bf16.xpose.msra.mxu0 0
    %237 = vmatprep.subr.bf16.mxu0 0
    %238 = vmatpush1.bf16.xpose.msra.mxu0 0
    %239 = vmatprep.subr.bf16.mxu0 0
    %240 = vmatpush1.bf16.xpose.msra.mxu0 0
    %241 = vmatprep.subr.bf16.mxu0 0
    %242 = vmatpush1.bf16.xpose.msra.mxu0 0
    %243 = vmatprep.subr.bf16.mxu0 0
    %244 = vmatpush1.bf16.xpose.msra.mxu0 0
    %245 = vmatprep.subr.bf16.mxu0 0
    %246 = vmatpush1.bf16.xpose.msra.mxu0 0
    %247 = vmatprep.subr.bf16.mxu0 0
    %248 = vmatpush1.bf16.xpose.msra.mxu0 0
    %249 = vmatprep.subr.bf16.mxu0 0
    %250 = vmatpush1.bf16.xpose.msra.mxu0 0
    %251 = vmatprep.subr.bf16.mxu0 0
    %252 = vmatpush1.bf16.xpose.msra.mxu0 0
    %253 = vmatprep.subr.bf16.mxu0 0
    %254 = vmatpush1.bf16.xpose.msra.mxu0 0
    %255 = vmatprep.subr.bf16.mxu0 0
    %256 = vmatpush1.bf16.xpose.msra.mxu0 0
    %257 = vmatprep.subr.bf16.mxu0 0
    %258 = vmatpush1.bf16.xpose.msra.mxu0 0
    %259 = vmatprep.subr.bf16.mxu0 0
    %260 = vmatpush1.bf16.xpose.msra.mxu0 0
    %261 = vmatprep.subr.bf16.mxu0 0
    %262 = vmatpush1.bf16.xpose.msra.mxu0 0
    %263 = vmatprep.subr.bf16.mxu0 0
    %264 = vmatpush1.bf16.xpose.msra.mxu0 0
    %265 = vmatprep.mubr.bf16.mxu0 0
    %266 = vmatmul.mubr.bf16.gmra.mrb[0].mxu0 %v228
    %v267 = vpop.f32.mrb[0].mxu0
    %v268 = vadd.f32 0.0, %v267
    %v269 = vpop.f32.mrb[0].mxu0
    %v270 = vpop.f32.mrb[0].mxu0
    %v271 = vpop.f32.mrb[0].mxu0
    %272 = vdwg.mxu0
    %v273 = vsel %vm177, %v219, -inf
    %274 = vmax.xlane.f32.xlu0 %v273
    %v275 = vpop.xlane.xlu0 %274
    %v276 = vsel %vm177, %v268, -inf
    %277 = vmax.xlane.f32.xlu0 %v276
    %v278 = vpop.xlane.xlu0 %277
    %v279 = vsub.f32 %v219, %v275
    %v280 = vsub.f32 %v268, %v278
    %v281 = vmul.f32 %v279, 1.442695
    %v282 = vpow.pop %v281
    %v283 = vmul.f32 %v280, 1.442695
    %v284 = vpow.pop %v283
    %v285 = vsel %vm177, %v282, 0.0
    %286 = vadd.xlane.f32.xlu0 %v285
    %v287 = vpop.xlane.xlu0 %286
    %v288 = vsel %vm177, %v284, 0.0
    %289 = vadd.xlane.f32.xlu0 %v288
    %v290 = vpop.xlane.xlu0 %289
    %v291 = vrcp.pop %v287
    %v292 = vrcp.pop %v290
    %v293 = vmul.f32 %v282, %v291
    %v294 = vmul.f32 %v284, %v292
    %v295 = vpack.c.bf16 %v293, %v293
    %v296 = vpack.c.bf16 %v294, %v294
    %297 = vrot.lane.b32.xlu0 %v174, 64
    %v298 = vpop.permute.xlu0 %297
    %v300 = vsel %vm177, %v295, 0
    %vm302 = vcmask 1043456
    %v304 = vsel %vm302, %v298, 0
    %306 = vmatprep.subr.bf16.mxu0 0
    %307 = vmatpush1.bf16.msra.mxu0 %v304
    %308 = vmatprep.subr.bf16.mxu0 0
    %309 = vmatpush1.bf16.msra.mxu0 0
    %310 = vmatprep.subr.bf16.mxu0 0
    %311 = vmatpush1.bf16.msra.mxu0 0
    %312 = vmatprep.subr.bf16.mxu0 0
    %313 = vmatpush1.bf16.msra.mxu0 0
    %314 = vmatprep.subr.bf16.mxu0 0
    %315 = vmatpush1.bf16.msra.mxu0 0
    %316 = vmatprep.subr.bf16.mxu0 0
    %317 = vmatpush1.bf16.msra.mxu0 0
    %318 = vmatprep.subr.bf16.mxu0 0
    %319 = vmatpush1.bf16.msra.mxu0 0
    %320 = vmatprep.subr.bf16.mxu0 0
    %321 = vmatpush1.bf16.msra.mxu0 0
    %322 = vmatprep.subr.bf16.mxu0 0
    %323 = vmatpush1.bf16.msra.mxu0 0
    %324 = vmatprep.subr.bf16.mxu0 0
    %325 = vmatpush1.bf16.msra.mxu0 0
    %326 = vmatprep.subr.bf16.mxu0 0
    %327 = vmatpush1.bf16.msra.mxu0 0
    %328 = vmatprep.subr.bf16.mxu0 0
    %329 = vmatpush1.bf16.msra.mxu0 0
    %330 = vmatprep.subr.bf16.mxu0 0
    %331 = vmatpush1.bf16.msra.mxu0 0
    %332 = vmatprep.subr.bf16.mxu0 0
    %333 = vmatpush1.bf16.msra.mxu0 0
    %334 = vmatprep.subr.bf16.mxu0 0
    %335 = vmatpush1.bf16.msra.mxu0 0
    %336 = vmatprep.subr.bf16.mxu0 0
    %337 = vmatpush1.bf16.msra.mxu0 0
    %338 = vmatprep.mubr.bf16.mxu0 0
    %339 = vmatmul.mubr.bf16.gmra.mrb[0].mxu0 %v300
    %v340 = vpop.f32.mrb[0].mxu0
    %v341 = vadd.f32 0.0, %v340
    %v342 = vpop.f32.mrb[0].mxu0
    %v343 = vpop.f32.mrb[0].mxu0
    %v344 = vpop.f32.mrb[0].mxu0
    %345 = vdwg.mxu0
    %346 = vrot.lane.b32.xlu0 %v224, 64
    %v347 = vpop.permute.xlu0 %346
    %v349 = vsel %vm177, %v296, 0
    %v352 = vsel %vm302, %v347, 0
    %354 = vmatprep.subr.bf16.mxu0 0
    %355 = vmatpush1.bf16.msra.mxu0 %v352
    %356 = vmatprep.subr.bf16.mxu0 0
    %357 = vmatpush1.bf16.msra.mxu0 0
    %358 = vmatprep.subr.bf16.mxu0 0
    %359 = vmatpush1.bf16.msra.mxu0 0
    %360 = vmatprep.subr.bf16.mxu0 0
    %361 = vmatpush1.bf16.msra.mxu0 0
    %362 = vmatprep.subr.bf16.mxu0 0
    %363 = vmatpush1.bf16.msra.mxu0 0
    %364 = vmatprep.subr.bf16.mxu0 0
    %365 = vmatpush1.bf16.msra.mxu0 0
    %366 = vmatprep.subr.bf16.mxu0 0
    %367 = vmatpush1.bf16.msra.mxu0 0
    %368 = vmatprep.subr.bf16.mxu0 0
    %369 = vmatpush1.bf16.msra.mxu0 0
    %370 = vmatprep.subr.bf16.mxu0 0
    %371 = vmatpush1.bf16.msra.mxu0 0
    %372 = vmatprep.subr.bf16.mxu0 0
    %373 = vmatpush1.bf16.msra.mxu0 0
    %374 = vmatprep.subr.bf16.mxu0 0
    %375 = vmatpush1.bf16.msra.mxu0 0
    %376 = vmatprep.subr.bf16.mxu0 0
    %377 = vmatpush1.bf16.msra.mxu0 0
    %378 = vmatprep.subr.bf16.mxu0 0
    %379 = vmatpush1.bf16.msra.mxu0 0
    %380 = vmatprep.subr.bf16.mxu0 0
    %381 = vmatpush1.bf16.msra.mxu0 0
    %382 = vmatprep.subr.bf16.mxu0 0
    %383 = vmatpush1.bf16.msra.mxu0 0
    %384 = vmatprep.subr.bf16.mxu0 0
    %385 = vmatpush1.bf16.msra.mxu0 0
    %386 = vmatprep.mubr.bf16.mxu0 0
    %387 = vmatmul.mubr.bf16.gmra.mrb[0].mxu0 %v349
    %v388 = vpop.f32.mrb[0].mxu0
    %v389 = vadd.f32 0.0, %v388
    %v390 = vpop.f32.mrb[0].mxu0
    %v391 = vpop.f32.mrb[0].mxu0
    %v392 = vpop.f32.mrb[0].mxu0
    %393 = vdwg.mxu0
    %394 = vrot.lane.b32.xlu0 %v169, 120
    %v395 = vpop.permute.xlu0 %394
    %396 = vrot.lane.b32.xlu0 %v174, 88
    %v397 = vpop.permute.xlu0 %396
    %v399 = vsel %vm177, %v395, 0
    %v402 = vsel %vm177, %v397, 0
    %404 = vmatprep.subr.bf16.mxu0 0
    %405 = vmatpush1.bf16.xpose.msra.mxu0 %v402
    %406 = vmatprep.subr.bf16.mxu0 0
    %407 = vmatpush1.bf16.xpose.msra.mxu0 0
    %408 = vmatprep.subr.bf16.mxu0 0
    %409 = vmatpush1.bf16.xpose.msra.mxu0 0
    %410 = vmatprep.subr.bf16.mxu0 0
    %411 = vmatpush1.bf16.xpose.msra.mxu0 0
    %412 = vmatprep.subr.bf16.mxu0 0
    %413 = vmatpush1.bf16.xpose.msra.mxu0 0
    %414 = vmatprep.subr.bf16.mxu0 0
    %415 = vmatpush1.bf16.xpose.msra.mxu0 0
    %416 = vmatprep.subr.bf16.mxu0 0
    %417 = vmatpush1.bf16.xpose.msra.mxu0 0
    %418 = vmatprep.subr.bf16.mxu0 0
    %419 = vmatpush1.bf16.xpose.msra.mxu0 0
    %420 = vmatprep.subr.bf16.mxu0 0
    %421 = vmatpush1.bf16.xpose.msra.mxu0 0
    %422 = vmatprep.subr.bf16.mxu0 0
    %423 = vmatpush1.bf16.xpose.msra.mxu0 0
    %424 = vmatprep.subr.bf16.mxu0 0
    %425 = vmatpush1.bf16.xpose.msra.mxu0 0
    %426 = vmatprep.subr.bf16.mxu0 0
    %427 = vmatpush1.bf16.xpose.msra.mxu0 0
    %428 = vmatprep.subr.bf16.mxu0 0
    %429 = vmatpush1.bf16.xpose.msra.mxu0 0
    %430 = vmatprep.subr.bf16.mxu0 0
    %431 = vmatpush1.bf16.xpose.msra.mxu0 0
    %432 = vmatprep.subr.bf16.mxu0 0
    %433 = vmatpush1.bf16.xpose.msra.mxu0 0
    %434 = vmatprep.subr.bf16.mxu0 0
    %435 = vmatpush1.bf16.xpose.msra.mxu0 0
    %436 = vmatprep.mubr.bf16.mxu0 0
    %437 = vmatmul.mubr.bf16.gmra.mrb[0].mxu0 %v399
    %v438 = vpop.f32.mrb[0].mxu0
    %v439 = vadd.f32 0.0, %v438
    %v440 = vpop.f32.mrb[0].mxu0
    %v441 = vpop.f32.mrb[0].mxu0
    %v442 = vpop.f32.mrb[0].mxu0
    %443 = vdwg.mxu0
    %444 = vrot.lane.b32.xlu0 %v170, 120
    %v445 = vpop.permute.xlu0 %444
    %446 = vrot.lane.b32.xlu0 %v224, 88
    %v447 = vpop.permute.xlu0 %446
    %v449 = vsel %vm177, %v445, 0
    %v452 = vsel %vm177, %v447, 0
    %454 = vmatprep.subr.bf16.mxu0 0
    %455 = vmatpush1.bf16.xpose.msra.mxu0 %v452
    %456 = vmatprep.subr.bf16.mxu0 0
    %457 = vmatpush1.bf16.xpose.msra.mxu0 0
    %458 = vmatprep.subr.bf16.mxu0 0
    %459 = vmatpush1.bf16.xpose.msra.mxu0 0
    %460 = vmatprep.subr.bf16.mxu0 0
    %461 = vmatpush1.bf16.xpose.msra.mxu0 0
    %462 = vmatprep.subr.bf16.mxu0 0
    %463 = vmatpush1.bf16.xpose.msra.mxu0 0
    %464 = vmatprep.subr.bf16.mxu0 0
    %465 = vmatpush1.bf16.xpose.msra.mxu0 0
    %466 = vmatprep.subr.bf16.mxu0 0
    %467 = vmatpush1.bf16.xpose.msra.mxu0 0
    %468 = vmatprep.subr.bf16.mxu0 0
    %469 = vmatpush1.bf16.xpose.msra.mxu0 0
    %470 = vmatprep.subr.bf16.mxu0 0
    %471 = vmatpush1.bf16.xpose.msra.mxu0 0
    %472 = vmatprep.subr.bf16.mxu0 0
    %473 = vmatpush1.bf16.xpose.msra.mxu0 0
    %474 = vmatprep.subr.bf16.mxu0 0
    %475 = vmatpush1.bf16.xpose.msra.mxu0 0
    %476 = vmatprep.subr.bf16.mxu0 0
    %477 = vmatpush1.bf16.xpose.msra.mxu0 0
    %478 = vmatprep.subr.bf16.mxu0 0
    %479 = vmatpush1.bf16.xpose.msra.mxu0 0
    %480 = vmatprep.subr.bf16.mxu0 0
    %481 = vmatpush1.bf16.xpose.msra.mxu0 0
    %482 = vmatprep.subr.bf16.mxu0 0
    %483 = vmatpush1.bf16.xpose.msra.mxu0 0
    %484 = vmatprep.subr.bf16.mxu0 0
    %485 = vmatpush1.bf16.xpose.msra.mxu0 0
    %486 = vmatprep.mubr.bf16.mxu0 0
    %487 = vmatmul.mubr.bf16.gmra.mrb[0].mxu0 %v449
    %v488 = vpop.f32.mrb[0].mxu0
    %v489 = vadd.f32 0.0, %v488
    %v490 = vpop.f32.mrb[0].mxu0
    %v491 = vpop.f32.mrb[0].mxu0
    %v492 = vpop.f32.mrb[0].mxu0
    %493 = vdwg.mxu0
    %v494 = vsel %vm177, %v439, -inf
    %495 = vmax.xlane.f32.xlu0 %v494
    %v496 = vpop.xlane.xlu0 %495
    %v497 = vsel %vm177, %v489, -inf
    %498 = vmax.xlane.f32.xlu0 %v497
    %v499 = vpop.xlane.xlu0 %498
    %v500 = vsub.f32 %v439, %v496
    %v501 = vsub.f32 %v489, %v499
    %v502 = vmul.f32 %v500, 1.442695
    %v503 = vpow.pop %v502
    %v504 = vmul.f32 %v501, 1.442695
    %v505 = vpow.pop %v504
    %v506 = vsel %vm177, %v503, 0.0
    %507 = vadd.xlane.f32.xlu0 %v506
    %v508 = vpop.xlane.xlu0 %507
    %v509 = vsel %vm177, %v505, 0.0
    %510 = vadd.xlane.f32.xlu0 %v509
    %v511 = vpop.xlane.xlu0 %510
    %v512 = vrcp.pop %v508
    %v513 = vrcp.pop %v511
    %v514 = vmul.f32 %v503, %v512
    %v515 = vmul.f32 %v505, %v513
    %v516 = vpack.c.bf16 %v514, %v514
    %v517 = vpack.c.bf16 %v515, %v515
    %518 = vrot.lane.b32.xlu0 %v174, 56
    %v519 = vpop.permute.xlu0 %518
    %v521 = vsel %vm177, %v516, 0
    %v524 = vsel %vm302, %v519, 0
    %526 = vmatprep.subr.bf16.mxu0 0
    %527 = vmatpush1.bf16.msra.mxu0 %v524
    %528 = vmatprep.subr.bf16.mxu0 0
    %529 = vmatpush1.bf16.msra.mxu0 0
    %530 = vmatprep.subr.bf16.mxu0 0
    %531 = vmatpush1.bf16.msra.mxu0 0
    %532 = vmatprep.subr.bf16.mxu0 0
    %533 = vmatpush1.bf16.msra.mxu0 0
    %534 = vmatprep.subr.bf16.mxu0 0
    %535 = vmatpush1.bf16.msra.mxu0 0
    %536 = vmatprep.subr.bf16.mxu0 0
    %537 = vmatpush1.bf16.msra.mxu0 0
    %538 = vmatprep.subr.bf16.mxu0 0
    %539 = vmatpush1.bf16.msra.mxu0 0
    %540 = vmatprep.subr.bf16.mxu0 0
    %541 = vmatpush1.bf16.msra.mxu0 0
    %542 = vmatprep.subr.bf16.mxu0 0
    %543 = vmatpush1.bf16.msra.mxu0 0
    %544 = vmatprep.subr.bf16.mxu0 0
    %545 = vmatpush1.bf16.msra.mxu0 0
    %546 = vmatprep.subr.bf16.mxu0 0
    %547 = vmatpush1.bf16.msra.mxu0 0
    %548 = vmatprep.subr.bf16.mxu0 0
    %549 = vmatpush1.bf16.msra.mxu0 0
    %550 = vmatprep.subr.bf16.mxu0 0
    %551 = vmatpush1.bf16.msra.mxu0 0
    %552 = vmatprep.subr.bf16.mxu0 0
    %553 = vmatpush1.bf16.msra.mxu0 0
    %554 = vmatprep.subr.bf16.mxu0 0
    %555 = vmatpush1.bf16.msra.mxu0 0
    %556 = vmatprep.subr.bf16.mxu0 0
    %557 = vmatpush1.bf16.msra.mxu0 0
    %558 = vmatprep.mubr.bf16.mxu0 0
    %559 = vmatmul.mubr.bf16.gmra.mrb[0].mxu0 %v521
    %v560 = vpop.f32.mrb[0].mxu0
    %v561 = vadd.f32 0.0, %v560
    %v562 = vpop.f32.mrb[0].mxu0
    %v563 = vpop.f32.mrb[0].mxu0
    %v564 = vpop.f32.mrb[0].mxu0
    %565 = vdwg.mxu0
    %566 = vrot.lane.b32.xlu0 %v224, 56
    %v567 = vpop.permute.xlu0 %566
    %v569 = vsel %vm177, %v517, 0
    %v572 = vsel %vm302, %v567, 0
    %574 = vmatprep.subr.bf16.mxu0 0
    %575 = vmatpush1.bf16.msra.mxu0 %v572
    %576 = vmatprep.subr.bf16.mxu0 0
    %577 = vmatpush1.bf16.msra.mxu0 0
    %578 = vmatprep.subr.bf16.mxu0 0
    %579 = vmatpush1.bf16.msra.mxu0 0
    %580 = vmatprep.subr.bf16.mxu0 0
    %581 = vmatpush1.bf16.msra.mxu0 0
    %582 = vmatprep.subr.bf16.mxu0 0
    %583 = vmatpush1.bf16.msra.mxu0 0
    %584 = vmatprep.subr.bf16.mxu0 0
    %585 = vmatpush1.bf16.msra.mxu0 0
    %586 = vmatprep.subr.bf16.mxu0 0
    %587 = vmatpush1.bf16.msra.mxu0 0
    %588 = vmatprep.subr.bf16.mxu0 0
    %589 = vmatpush1.bf16.msra.mxu0 0
    %590 = vmatprep.subr.bf16.mxu0 0
    %591 = vmatpush1.bf16.msra.mxu0 0
    %592 = vmatprep.subr.bf16.mxu0 0
    %593 = vmatpush1.bf16.msra.mxu0 0
    %594 = vmatprep.subr.bf16.mxu0 0
    %595 = vmatpush1.bf16.msra.mxu0 0
    %596 = vmatprep.subr.bf16.mxu0 0
    %597 = vmatpush1.bf16.msra.mxu0 0
    %598 = vmatprep.subr.bf16.mxu0 0
    %599 = vmatpush1.bf16.msra.mxu0 0
    %600 = vmatprep.subr.bf16.mxu0 0
    %601 = vmatpush1.bf16.msra.mxu0 0
    %602 = vmatprep.subr.bf16.mxu0 0
    %603 = vmatpush1.bf16.msra.mxu0 0
    %604 = vmatprep.subr.bf16.mxu0 0
    %605 = vmatpush1.bf16.msra.mxu0 0
    %606 = vmatprep.mubr.bf16.mxu0 0
    %607 = vmatmul.mubr.bf16.gmra.mrb[0].mxu0 %v569
    %v608 = vpop.f32.mrb[0].mxu0
    %v609 = vadd.f32 0.0, %v608
    %v610 = vpop.f32.mrb[0].mxu0
    %v611 = vpop.f32.mrb[0].mxu0
    %v612 = vpop.f32.mrb[0].mxu0
    %613 = vdwg.mxu0
    %614 = vrot.lane.b32.xlu0 %v169, 112
    %v615 = vpop.permute.xlu0 %614
    %616 = vrot.lane.b32.xlu0 %v174, 80
    %v617 = vpop.permute.xlu0 %616
    %v619 = vsel %vm177, %v615, 0
    %v622 = vsel %vm177, %v617, 0
    %624 = vmatprep.subr.bf16.mxu0 0
    %625 = vmatpush1.bf16.xpose.msra.mxu0 %v622
    %626 = vmatprep.subr.bf16.mxu0 0
    %627 = vmatpush1.bf16.xpose.msra.mxu0 0
    %628 = vmatprep.subr.bf16.mxu0 0
    %629 = vmatpush1.bf16.xpose.msra.mxu0 0
    %630 = vmatprep.subr.bf16.mxu0 0
    %631 = vmatpush1.bf16.xpose.msra.mxu0 0
    %632 = vmatprep.subr.bf16.mxu0 0
    %633 = vmatpush1.bf16.xpose.msra.mxu0 0
    %634 = vmatprep.subr.bf16.mxu0 0
    %635 = vmatpush1.bf16.xpose.msra.mxu0 0
    %636 = vmatprep.subr.bf16.mxu0 0
    %637 = vmatpush1.bf16.xpose.msra.mxu0 0
    %638 = vmatprep.subr.bf16.mxu0 0
    %639 = vmatpush1.bf16.xpose.msra.mxu0 0
    %640 = vmatprep.subr.bf16.mxu0 0
    %641 = vmatpush1.bf16.xpose.msra.mxu0 0
    %642 = vmatprep.subr.bf16.mxu0 0
    %643 = vmatpush1.bf16.xpose.msra.mxu0 0
    %644 = vmatprep.subr.bf16.mxu0 0
    %645 = vmatpush1.bf16.xpose.msra.mxu0 0
    %646 = vmatprep.subr.bf16.mxu0 0
    %647 = vmatpush1.bf16.xpose.msra.mxu0 0
    %648 = vmatprep.subr.bf16.mxu0 0
    %649 = vmatpush1.bf16.xpose.msra.mxu0 0
    %650 = vmatprep.subr.bf16.mxu0 0
    %651 = vmatpush1.bf16.xpose.msra.mxu0 0
    %652 = vmatprep.subr.bf16.mxu0 0
    %653 = vmatpush1.bf16.xpose.msra.mxu0 0
    %654 = vmatprep.subr.bf16.mxu0 0
    %655 = vmatpush1.bf16.xpose.msra.mxu0 0
    %656 = vmatprep.mubr.bf16.mxu0 0
    %657 = vmatmul.mubr.bf16.gmra.mrb[0].mxu0 %v619
    %v658 = vpop.f32.mrb[0].mxu0
    %v659 = vadd.f32 0.0, %v658
    %v660 = vpop.f32.mrb[0].mxu0
    %v661 = vpop.f32.mrb[0].mxu0
    %v662 = vpop.f32.mrb[0].mxu0
    %663 = vdwg.mxu0
    %664 = vrot.lane.b32.xlu0 %v170, 112
    %v665 = vpop.permute.xlu0 %664
    %666 = vrot.lane.b32.xlu0 %v224, 80
    %v667 = vpop.permute.xlu0 %666
    %v669 = vsel %vm177, %v665, 0
    %v672 = vsel %vm177, %v667, 0
    %674 = vmatprep.subr.bf16.mxu0 0
    %675 = vmatpush1.bf16.xpose.msra.mxu0 %v672
    %676 = vmatprep.subr.bf16.mxu0 0
    %677 = vmatpush1.bf16.xpose.msra.mxu0 0
    %678 = vmatprep.subr.bf16.mxu0 0
    %679 = vmatpush1.bf16.xpose.msra.mxu0 0
    %680 = vmatprep.subr.bf16.mxu0 0
    %681 = vmatpush1.bf16.xpose.msra.mxu0 0
    %682 = vmatprep.subr.bf16.mxu0 0
    %683 = vmatpush1.bf16.xpose.msra.mxu0 0
    %684 = vmatprep.subr.bf16.mxu0 0
    %685 = vmatpush1.bf16.xpose.msra.mxu0 0
    %686 = vmatprep.subr.bf16.mxu0 0
    %687 = vmatpush1.bf16.xpose.msra.mxu0 0
    %688 = vmatprep.subr.bf16.mxu0 0
    %689 = vmatpush1.bf16.xpose.msra.mxu0 0
    %690 = vmatprep.subr.bf16.mxu0 0
    %691 = vmatpush1.bf16.xpose.msra.mxu0 0
    %692 = vmatprep.subr.bf16.mxu0 0
    %693 = vmatpush1.bf16.xpose.msra.mxu0 0
    %694 = vmatprep.subr.bf16.mxu0 0
    %695 = vmatpush1.bf16.xpose.msra.mxu0 0
    %696 = vmatprep.subr.bf16.mxu0 0
    %697 = vmatpush1.bf16.xpose.msra.mxu0 0
    %698 = vmatprep.subr.bf16.mxu0 0
    %699 = vmatpush1.bf16.xpose.msra.mxu0 0
    %700 = vmatprep.subr.bf16.mxu0 0
    %701 = vmatpush1.bf16.xpose.msra.mxu0 0
    %702 = vmatprep.subr.bf16.mxu0 0
    %703 = vmatpush1.bf16.xpose.msra.mxu0 0
    %704 = vmatprep.subr.bf16.mxu0 0
    %705 = vmatpush1.bf16.xpose.msra.mxu0 0
    %706 = vmatprep.mubr.bf16.mxu0 0
    %707 = vmatmul.mubr.bf16.gmra.mrb[0].mxu0 %v669
    %v708 = vpop.f32.mrb[0].mxu0
    %v709 = vadd.f32 0.0, %v708
    %v710 = vpop.f32.mrb[0].mxu0
    %v711 = vpop.f32.mrb[0].mxu0
    %v712 = vpop.f32.mrb[0].mxu0
    %713 = vdwg.mxu0
    %v714 = vsel %vm177, %v659, -inf
    %715 = vmax.xlane.f32.xlu0 %v714
    %v716 = vpop.xlane.xlu0 %715
    %v717 = vsel %vm177, %v709, -inf
    %718 = vmax.xlane.f32.xlu0 %v717
    %v719 = vpop.xlane.xlu0 %718
    %v720 = vsub.f32 %v659, %v716
    %v721 = vsub.f32 %v709, %v719
    %v722 = vmul.f32 %v720, 1.442695
    %v723 = vpow.pop %v722
    %v724 = vmul.f32 %v721, 1.442695
    %v725 = vpow.pop %v724
    %v726 = vsel %vm177, %v723, 0.0
    %727 = vadd.xlane.f32.xlu0 %v726
    %v728 = vpop.xlane.xlu0 %727
    %v729 = vsel %vm177, %v725, 0.0
    %730 = vadd.xlane.f32.xlu0 %v729
    %v731 = vpop.xlane.xlu0 %730
    %v732 = vrcp.pop %v728
    %v733 = vrcp.pop %v731
    %v734 = vmul.f32 %v723, %v732
    %v735 = vmul.f32 %v725, %v733
    %v736 = vpack.c.bf16 %v734, %v734
    %v737 = vpack.c.bf16 %v735, %v735
    %738 = vrot.lane.b32.xlu0 %v174, 48
    %v739 = vpop.permute.xlu0 %738
    %v741 = vsel %vm177, %v736, 0
    %v744 = vsel %vm302, %v739, 0
    %746 = vmatprep.subr.bf16.mxu0 0
    %747 = vmatpush1.bf16.msra.mxu0 %v744
    %748 = vmatprep.subr.bf16.mxu0 0
    %749 = vmatpush1.bf16.msra.mxu0 0
    %750 = vmatprep.subr.bf16.mxu0 0
    %751 = vmatpush1.bf16.msra.mxu0 0
    %752 = vmatprep.subr.bf16.mxu0 0
    %753 = vmatpush1.bf16.msra.mxu0 0
    %754 = vmatprep.subr.bf16.mxu0 0
    %755 = vmatpush1.bf16.msra.mxu0 0
    %756 = vmatprep.subr.bf16.mxu0 0
    %757 = vmatpush1.bf16.msra.mxu0 0
    %758 = vmatprep.subr.bf16.mxu0 0
    %759 = vmatpush1.bf16.msra.mxu0 0
    %760 = vmatprep.subr.bf16.mxu0 0
    %761 = vmatpush1.bf16.msra.mxu0 0
    %762 = vmatprep.subr.bf16.mxu0 0
    %763 = vmatpush1.bf16.msra.mxu0 0
    %764 = vmatprep.subr.bf16.mxu0 0
    %765 = vmatpush1.bf16.msra.mxu0 0
    %766 = vmatprep.subr.bf16.mxu0 0
    %767 = vmatpush1.bf16.msra.mxu0 0
    %768 = vmatprep.subr.bf16.mxu0 0
    %769 = vmatpush1.bf16.msra.mxu0 0
    %770 = vmatprep.subr.bf16.mxu0 0
    %771 = vmatpush1.bf16.msra.mxu0 0
    %772 = vmatprep.subr.bf16.mxu0 0
    %773 = vmatpush1.bf16.msra.mxu0 0
    %774 = vmatprep.subr.bf16.mxu0 0
    %775 = vmatpush1.bf16.msra.mxu0 0
    %776 = vmatprep.subr.bf16.mxu0 0
    %777 = vmatpush1.bf16.msra.mxu0 0
    %778 = vmatprep.mubr.bf16.mxu0 0
    %779 = vmatmul.mubr.bf16.gmra.mrb[0].mxu0 %v741
    %v780 = vpop.f32.mrb[0].mxu0
    %v781 = vadd.f32 0.0, %v780
    %v782 = vpop.f32.mrb[0].mxu0
    %v783 = vpop.f32.mrb[0].mxu0
    %v784 = vpop.f32.mrb[0].mxu0
    %785 = vdwg.mxu0
    %786 = vrot.lane.b32.xlu0 %v224, 48
    %v787 = vpop.permute.xlu0 %786
    %v789 = vsel %vm177, %v737, 0
    %v792 = vsel %vm302, %v787, 0
    %794 = vmatprep.subr.bf16.mxu0 0
    %795 = vmatpush1.bf16.msra.mxu0 %v792
    %796 = vmatprep.subr.bf16.mxu0 0
    %797 = vmatpush1.bf16.msra.mxu0 0
    %798 = vmatprep.subr.bf16.mxu0 0
    %799 = vmatpush1.bf16.msra.mxu0 0
    %800 = vmatprep.subr.bf16.mxu0 0
    %801 = vmatpush1.bf16.msra.mxu0 0
    %802 = vmatprep.subr.bf16.mxu0 0
    %803 = vmatpush1.bf16.msra.mxu0 0
    %804 = vmatprep.subr.bf16.mxu0 0
    %805 = vmatpush1.bf16.msra.mxu0 0
    %806 = vmatprep.subr.bf16.mxu0 0
    %807 = vmatpush1.bf16.msra.mxu0 0
    %808 = vmatprep.subr.bf16.mxu0 0
    %809 = vmatpush1.bf16.msra.mxu0 0
    %810 = vmatprep.subr.bf16.mxu0 0
    %811 = vmatpush1.bf16.msra.mxu0 0
    %812 = vmatprep.subr.bf16.mxu0 0
    %813 = vmatpush1.bf16.msra.mxu0 0
    %814 = vmatprep.subr.bf16.mxu0 0
    %815 = vmatpush1.bf16.msra.mxu0 0
    %816 = vmatprep.subr.bf16.mxu0 0
    %817 = vmatpush1.bf16.msra.mxu0 0
    %818 = vmatprep.subr.bf16.mxu0 0
    %819 = vmatpush1.bf16.msra.mxu0 0
    %820 = vmatprep.subr.bf16.mxu0 0
    %821 = vmatpush1.bf16.msra.mxu0 0
    %822 = vmatprep.subr.bf16.mxu0 0
    %823 = vmatpush1.bf16.msra.mxu0 0
    %824 = vmatprep.subr.bf16.mxu0 0
    %825 = vmatpush1.bf16.msra.mxu0 0
    %826 = vmatprep.mubr.bf16.mxu0 0
    %827 = vmatmul.mubr.bf16.gmra.mrb[0].mxu0 %v789
    %v828 = vpop.f32.mrb[0].mxu0
    %v829 = vadd.f32 0.0, %v828
    %v830 = vpop.f32.mrb[0].mxu0
    %v831 = vpop.f32.mrb[0].mxu0
    %v832 = vpop.f32.mrb[0].mxu0
    %833 = vdwg.mxu0
    %834 = vrot.lane.b32.xlu0 %v169, 104
    %v835 = vpop.permute.xlu0 %834
    %836 = vrot.lane.b32.xlu0 %v174, 72
    %v837 = vpop.permute.xlu0 %836
    %v839 = vsel %vm177, %v835, 0
    %v842 = vsel %vm177, %v837, 0
    %844 = vmatprep.subr.bf16.mxu0 0
    %845 = vmatpush1.bf16.xpose.msra.mxu0 %v842
    %846 = vmatprep.subr.bf16.mxu0 0
    %847 = vmatpush1.bf16.xpose.msra.mxu0 0
    %848 = vmatprep.subr.bf16.mxu0 0
    %849 = vmatpush1.bf16.xpose.msra.mxu0 0
    %850 = vmatprep.subr.bf16.mxu0 0
    %851 = vmatpush1.bf16.xpose.msra.mxu0 0
    %852 = vmatprep.subr.bf16.mxu0 0
    %853 = vmatpush1.bf16.xpose.msra.mxu0 0
    %854 = vmatprep.subr.bf16.mxu0 0
    %855 = vmatpush1.bf16.xpose.msra.mxu0 0
    %856 = vmatprep.subr.bf16.mxu0 0
    %857 = vmatpush1.bf16.xpose.msra.mxu0 0
    %858 = vmatprep.subr.bf16.mxu0 0
    %859 = vmatpush1.bf16.xpose.msra.mxu0 0
    %860 = vmatprep.subr.bf16.mxu0 0
    %861 = vmatpush1.bf16.xpose.msra.mxu0 0
    %862 = vmatprep.subr.bf16.mxu0 0
    %863 = vmatpush1.bf16.xpose.msra.mxu0 0
    %864 = vmatprep.subr.bf16.mxu0 0
    %865 = vmatpush1.bf16.xpose.msra.mxu0 0
    %866 = vmatprep.subr.bf16.mxu0 0
    %867 = vmatpush1.bf16.xpose.msra.mxu0 0
    %868 = vmatprep.subr.bf16.mxu0 0
    %869 = vmatpush1.bf16.xpose.msra.mxu0 0
    %870 = vmatprep.subr.bf16.mxu0 0
    %871 = vmatpush1.bf16.xpose.msra.mxu0 0
    %872 = vmatprep.subr.bf16.mxu0 0
    %873 = vmatpush1.bf16.xpose.msra.mxu0 0
    %874 = vmatprep.subr.bf16.mxu0 0
    %875 = vmatpush1.bf16.xpose.msra.mxu0 0
    %876 = vmatprep.mubr.bf16.mxu0 0
    %877 = vmatmul.mubr.bf16.gmra.mrb[0].mxu0 %v839
    %v878 = vpop.f32.mrb[0].mxu0
    %v879 = vadd.f32 0.0, %v878
    %v880 = vpop.f32.mrb[0].mxu0
    %v881 = vpop.f32.mrb[0].mxu0
    %v882 = vpop.f32.mrb[0].mxu0
    %883 = vdwg.mxu0
    %884 = vrot.lane.b32.xlu0 %v170, 104
    %v885 = vpop.permute.xlu0 %884
    %886 = vrot.lane.b32.xlu0 %v224, 72
    %v887 = vpop.permute.xlu0 %886
    %v889 = vsel %vm177, %v885, 0
    %v892 = vsel %vm177, %v887, 0
    %894 = vmatprep.subr.bf16.mxu0 0
    %895 = vmatpush1.bf16.xpose.msra.mxu0 %v892
    %896 = vmatprep.subr.bf16.mxu0 0
    %897 = vmatpush1.bf16.xpose.msra.mxu0 0
    %898 = vmatprep.subr.bf16.mxu0 0
    %899 = vmatpush1.bf16.xpose.msra.mxu0 0
    %900 = vmatprep.subr.bf16.mxu0 0
    %901 = vmatpush1.bf16.xpose.msra.mxu0 0
    %902 = vmatprep.subr.bf16.mxu0 0
    %903 = vmatpush1.bf16.xpose.msra.mxu0 0
    %904 = vmatprep.subr.bf16.mxu0 0
    %905 = vmatpush1.bf16.xpose.msra.mxu0 0
    %906 = vmatprep.subr.bf16.mxu0 0
    %907 = vmatpush1.bf16.xpose.msra.mxu0 0
    %908 = vmatprep.subr.bf16.mxu0 0
    %909 = vmatpush1.bf16.xpose.msra.mxu0 0
    %910 = vmatprep.subr.bf16.mxu0 0
    %911 = vmatpush1.bf16.xpose.msra.mxu0 0
    %912 = vmatprep.subr.bf16.mxu0 0
    %913 = vmatpush1.bf16.xpose.msra.mxu0 0
    %914 = vmatprep.subr.bf16.mxu0 0
    %915 = vmatpush1.bf16.xpose.msra.mxu0 0
    %916 = vmatprep.subr.bf16.mxu0 0
    %917 = vmatpush1.bf16.xpose.msra.mxu0 0
    %918 = vmatprep.subr.bf16.mxu0 0
    %919 = vmatpush1.bf16.xpose.msra.mxu0 0
    %920 = vmatprep.subr.bf16.mxu0 0
    %921 = vmatpush1.bf16.xpose.msra.mxu0 0
    %922 = vmatprep.subr.bf16.mxu0 0
    %923 = vmatpush1.bf16.xpose.msra.mxu0 0
    %924 = vmatprep.subr.bf16.mxu0 0
    %925 = vmatpush1.bf16.xpose.msra.mxu0 0
    %926 = vmatprep.mubr.bf16.mxu0 0
    %927 = vmatmul.mubr.bf16.gmra.mrb[0].mxu0 %v889
    %v928 = vpop.f32.mrb[0].mxu0
    %v929 = vadd.f32 0.0, %v928
    %v930 = vpop.f32.mrb[0].mxu0
    %v931 = vpop.f32.mrb[0].mxu0
    %v932 = vpop.f32.mrb[0].mxu0
    %933 = vdwg.mxu0
    %v934 = vsel %vm177, %v879, -inf
    %935 = vmax.xlane.f32.xlu0 %v934
    %v936 = vpop.xlane.xlu0 %935
    %v937 = vsel %vm177, %v929, -inf
    %938 = vmax.xlane.f32.xlu0 %v937
    %v939 = vpop.xlane.xlu0 %938
    %v940 = vsub.f32 %v879, %v936
    %v941 = vsub.f32 %v929, %v939
    %v942 = vmul.f32 %v940, 1.442695
    %v943 = vpow.pop %v942
    %v944 = vmul.f32 %v941, 1.442695
    %v945 = vpow.pop %v944
    %v946 = vsel %vm177, %v943, 0.0
    %947 = vadd.xlane.f32.xlu0 %v946
    %v948 = vpop.xlane.xlu0 %947
    %v949 = vsel %vm177, %v945, 0.0
    %950 = vadd.xlane.f32.xlu0 %v949
    %v951 = vpop.xlane.xlu0 %950
    %v952 = vrcp.pop %v948
    %v953 = vrcp.pop %v951
    %v954 = vmul.f32 %v943, %v952
    %v955 = vmul.f32 %v945, %v953
    %v956 = vpack.c.bf16 %v954, %v954
    %v957 = vpack.c.bf16 %v955, %v955
    %958 = vrot.lane.b32.xlu0 %v174, 40
    %v959 = vpop.permute.xlu0 %958
    %v961 = vsel %vm177, %v956, 0
    %v964 = vsel %vm302, %v959, 0
    %966 = vmatprep.subr.bf16.mxu0 0
    %967 = vmatpush1.bf16.msra.mxu0 %v964
    %968 = vmatprep.subr.bf16.mxu0 0
    %969 = vmatpush1.bf16.msra.mxu0 0
    %970 = vmatprep.subr.bf16.mxu0 0
    %971 = vmatpush1.bf16.msra.mxu0 0
    %972 = vmatprep.subr.bf16.mxu0 0
    %973 = vmatpush1.bf16.msra.mxu0 0
    %974 = vmatprep.subr.bf16.mxu0 0
    %975 = vmatpush1.bf16.msra.mxu0 0
    %976 = vmatprep.subr.bf16.mxu0 0
    %977 = vmatpush1.bf16.msra.mxu0 0
    %978 = vmatprep.subr.bf16.mxu0 0
    %979 = vmatpush1.bf16.msra.mxu0 0
    %980 = vmatprep.subr.bf16.mxu0 0
    %981 = vmatpush1.bf16.msra.mxu0 0
    %982 = vmatprep.subr.bf16.mxu0 0
    %983 = vmatpush1.bf16.msra.mxu0 0
    %984 = vmatprep.subr.bf16.mxu0 0
    %985 = vmatpush1.bf16.msra.mxu0 0
    %986 = vmatprep.subr.bf16.mxu0 0
    %987 = vmatpush1.bf16.msra.mxu0 0
    %988 = vmatprep.subr.bf16.mxu0 0
    %989 = vmatpush1.bf16.msra.mxu0 0
    %990 = vmatprep.subr.bf16.mxu0 0
    %991 = vmatpush1.bf16.msra.mxu0 0
    %992 = vmatprep.subr.bf16.mxu0 0
    %993 = vmatpush1.bf16.msra.mxu0 0
    %994 = vmatprep.subr.bf16.mxu0 0
    %995 = vmatpush1.bf16.msra.mxu0 0
    %996 = vmatprep.subr.bf16.mxu0 0
    %997 = vmatpush1.bf16.msra.mxu0 0
    %998 = vmatprep.mubr.bf16.mxu0 0
    %999 = vmatmul.mubr.bf16.gmra.mrb[0].mxu0 %v961
    %v1000 = vpop.f32.mrb[0].mxu0
    %v1001 = vadd.f32 0.0, %v1000
    %v1002 = vpop.f32.mrb[0].mxu0
    %v1003 = vpop.f32.mrb[0].mxu0
    %v1004 = vpop.f32.mrb[0].mxu0
    %1005 = vdwg.mxu0
    %1006 = vrot.lane.b32.xlu0 %v224, 40
    %v1007 = vpop.permute.xlu0 %1006
    %v1009 = vsel %vm177, %v957, 0
    %v1012 = vsel %vm302, %v1007, 0
    %1014 = vmatprep.subr.bf16.mxu0 0
    %1015 = vmatpush1.bf16.msra.mxu0 %v1012
    %1016 = vmatprep.subr.bf16.mxu0 0
    %1017 = vmatpush1.bf16.msra.mxu0 0
    %1018 = vmatprep.subr.bf16.mxu0 0
    %1019 = vmatpush1.bf16.msra.mxu0 0
    %1020 = vmatprep.subr.bf16.mxu0 0
    %1021 = vmatpush1.bf16.msra.mxu0 0
    %1022 = vmatprep.subr.bf16.mxu0 0
    %1023 = vmatpush1.bf16.msra.mxu0 0
    %1024 = vmatprep.subr.bf16.mxu0 0
    %1025 = vmatpush1.bf16.msra.mxu0 0
    %1026 = vmatprep.subr.bf16.mxu0 0
    %1027 = vmatpush1.bf16.msra.mxu0 0
    %1028 = vmatprep.subr.bf16.mxu0 0
    %1029 = vmatpush1.bf16.msra.mxu0 0
    %1030 = vmatprep.subr.bf16.mxu0 0
    %1031 = vmatpush1.bf16.msra.mxu0 0
    %1032 = vmatprep.subr.bf16.mxu0 0
    %1033 = vmatpush1.bf16.msra.mxu0 0
    %1034 = vmatprep.subr.bf16.mxu0 0
    %1035 = vmatpush1.bf16.msra.mxu0 0
    %1036 = vmatprep.subr.bf16.mxu0 0
    %1037 = vmatpush1.bf16.msra.mxu0 0
    %1038 = vmatprep.subr.bf16.mxu0 0
    %1039 = vmatpush1.bf16.msra.mxu0 0
    %1040 = vmatprep.subr.bf16.mxu0 0
    %1041 = vmatpush1.bf16.msra.mxu0 0
    %1042 = vmatprep.subr.bf16.mxu0 0
    %1043 = vmatpush1.bf16.msra.mxu0 0
    %1044 = vmatprep.subr.bf16.mxu0 0
    %1045 = vmatpush1.bf16.msra.mxu0 0
    %1046 = vmatprep.mubr.bf16.mxu0 0
    %1047 = vmatmul.mubr.bf16.gmra.mrb[0].mxu0 %v1009
    %v1048 = vpop.f32.mrb[0].mxu0
    %v1049 = vadd.f32 0.0, %v1048
    %v1050 = vpop.f32.mrb[0].mxu0
    %v1051 = vpop.f32.mrb[0].mxu0
    %v1052 = vpop.f32.mrb[0].mxu0
    %1053 = vdwg.mxu0
    %1056 = vrot.lane.b32.xlu0 %v561, 8
    %v1057 = vpop.permute.xlu0 %1056
    %1058 = vrot.lane.b32.xlu0 %v609, 8
    %v1059 = vpop.permute.xlu0 %1058
    %1064 = vrot.lane.b32.xlu0 %v781, 16
    %v1065 = vpop.permute.xlu0 %1064
    %1066 = vrot.lane.b32.xlu0 %v829, 16
    %v1067 = vpop.permute.xlu0 %1066
    %1072 = vrot.lane.b32.xlu0 %v1001, 24
    %v1073 = vpop.permute.xlu0 %1072
    %1074 = vrot.lane.b32.xlu0 %v1049, 24
    %v1075 = vpop.permute.xlu0 %1074
    %v1078 = vsel %vm177, %v341, %v1057
    %v1079 = vsel %vm177, %v389, %v1059
    %vm1080 = vcmask 130048
    %v1081 = vsel %vm1080, %v1078, %v1065
    %v1082 = vsel %vm1080, %v1079, %v1067
    %vm1083 = vcmask 195584
    %v1084 = vsel %vm1083, %v1081, %v1073
    %v1085 = vsel %vm1083, %v1082, %v1075
    %v1086 = vpack.c.bf16 %v1085, %v1084
    %v1087 = vld [vmem:[%s5] sm:$0xf]
    %v1088 = vld [vmem:[%s5 + $0x4] sm:$0xf]
    %v1089 = vld [vmem:[%s5 + $0x8] sm:$0xf]
    %v1090 = vld [vmem:[%s5 + $0xc] sm:$0xf]
    %v1091 = vld [vmem:[%s6] sm:$0x1]
    %v1093 = vlaneseq
    %v1094 = vshrl.u32 %v1093, 7
    %v1095 = vsub.s32 0, %v1094
    %v1096 = vrot.slane %v1091, %v1095
    %v1102 = vunpack.c.l.b16 %v1087
    %v1103 = vunpack.c.l.b16 %v1088
    %v1104 = vunpack.c.l.b16 %v1089
    %v1105 = vunpack.c.l.b16 %v1090
    %v1106 = vpack.c.b16 %v1103, %v1102
    %v1107 = vpack.c.b16 %v1105, %v1104
    %v1111 = vsel %vm50, %v1086, 0
    %1113 = vmatprep.subr.bf16.mxu0 0
    %1114 = vmatpush1.bf16.msra.mxu0 %v1106
    %1115 = vmatprep.subr.bf16.mxu0 0
    %1116 = vmatpush1.bf16.msra.mxu0 %v1107
    %1117 = vmatprep.subr.bf16.mxu0 0
    %1118 = vmatpush1.bf16.msra.mxu0 0
    %1119 = vmatprep.subr.bf16.mxu0 0
    %1120 = vmatpush1.bf16.msra.mxu0 0
    %1121 = vmatprep.subr.bf16.mxu0 0
    %1122 = vmatpush1.bf16.msra.mxu0 0
    %1123 = vmatprep.subr.bf16.mxu0 0
    %1124 = vmatpush1.bf16.msra.mxu0 0
    %1125 = vmatprep.subr.bf16.mxu0 0
    %1126 = vmatpush1.bf16.msra.mxu0 0
    %1127 = vmatprep.subr.bf16.mxu0 0
    %1128 = vmatpush1.bf16.msra.mxu0 0
    %1129 = vmatprep.subr.bf16.mxu0 0
    %1130 = vmatpush1.bf16.msra.mxu0 0
    %1131 = vmatprep.subr.bf16.mxu0 0
    %1132 = vmatpush1.bf16.msra.mxu0 0
    %1133 = vmatprep.subr.bf16.mxu0 0
    %1134 = vmatpush1.bf16.msra.mxu0 0
    %1135 = vmatprep.subr.bf16.mxu0 0
    %1136 = vmatpush1.bf16.msra.mxu0 0
    %1137 = vmatprep.subr.bf16.mxu0 0
    %1138 = vmatpush1.bf16.msra.mxu0 0
    %1139 = vmatprep.subr.bf16.mxu0 0
    %1140 = vmatpush1.bf16.msra.mxu0 0
    %1141 = vmatprep.subr.bf16.mxu0 0
    %1142 = vmatpush1.bf16.msra.mxu0 0
    %1143 = vmatprep.subr.bf16.mxu0 0
    %1144 = vmatpush1.bf16.msra.mxu0 0
    %1145 = vmatprep.mubr.bf16.mxu0 0
    %1146 = vmatmul.mubr.bf16.gmra.mrb[0].mxu0 %v1111
    %v1147 = vpop.f32.mrb[0].mxu0
    %v1148 = vadd.f32 %v1096, %v1147
    %v1149 = vpop.f32.mrb[0].mxu0
    %v1150 = vpop.f32.mrb[0].mxu0
    %v1151 = vadd.f32 %v1096, %v1150
    %v1152 = vpop.f32.mrb[0].mxu0
    %1153 = vdwg.mxu0
    %v1154 = vadd.f32 %v46, %v1148
    %v1155 = vadd.f32 %v47, %v1151
    %v1156 = vld [vmem:[%s7] sm:$0x1]
    %v1157 = vld [vmem:[%s8] sm:$0x1]
    %v1158 = vsel %vm50, %v1154, 0.0
    %1159 = vadd.xlane.f32.xlu0 %v1158
    %v1160 = vpop.xlane.xlu0 %1159
    %v1161 = vsel %vm50, %v1155, 0.0
    %1162 = vadd.xlane.f32.xlu0 %v1161
    %v1163 = vpop.xlane.xlu0 %1162
    %v1164 = vmul.f32 %v1160, %v57
    %v1165 = vmul.f32 %v1163, %v57
    %v1166 = vsub.f32 %v1154, %v1164
    %v1167 = vsub.f32 %v1155, %v1165
    %v1168 = vmul.f32 %v1166, %v1166
    %v1169 = vmul.f32 %v1167, %v1167
    %v1170 = vsel %vm50, %v1168, 0.0
    %1171 = vadd.xlane.f32.xlu0 %v1170
    %v1172 = vpop.xlane.xlu0 %1171
    %v1173 = vsel %vm50, %v1169, 0.0
    %1174 = vadd.xlane.f32.xlu0 %v1173
    %v1175 = vpop.xlane.xlu0 %1174
    %v1176 = vmul.f32 %v1172, %v57
    %v1177 = vmul.f32 %v1175, %v57
    %v1178 = vadd.f32 %v1176, 1e-05
    %v1179 = vadd.f32 %v1177, 1e-05
    %v1180 = vrsqrt.pop %v1178
    %v1181 = vrsqrt.pop %v1179
    %v1182 = vmul.f32 %v1166, %v1180
    %v1183 = vmul.f32 %v1167, %v1181
    %v1185 = vlaneseq
    %v1186 = vshrl.u32 %v1185, 7
    %v1187 = vsub.s32 0, %v1186
    %v1188 = vrot.slane %v1156, %v1187
    %v1190 = vmul.f32 %v1182, %v1188
    %v1191 = vmul.f32 %v1183, %v1188
    %v1193 = vlaneseq
    %v1194 = vshrl.u32 %v1193, 7
    %v1195 = vsub.s32 0, %v1194
    %v1196 = vrot.slane %v1157, %v1195
    %v1198 = vadd.f32 %v1190, %v1196
    %v1199 = vadd.f32 %v1191, %v1196
    %v1200 = vpack.c.bf16 %v1199, %v1198
    %v1201 = vld [vmem:[%s9] sm:$0xf]
    %v1202 = vld [vmem:[%s9 + $0x4] sm:$0xf]
    %v1203 = vld [vmem:[%s9 + $0x8] sm:$0xf]
    %v1204 = vld [vmem:[%s9 + $0xc] sm:$0xf]
    %v1205 = vld [vmem:[%s10] sm:$0x1]
    %v1207 = vlaneseq
    %v1208 = vshrl.u32 %v1207, 7
    %v1209 = vsub.s32 0, %v1208
    %v1210 = vrot.slane %v1205, %v1209
    %v1216 = vunpack.c.l.b16 %v1201
    %v1217 = vunpack.c.l.b16 %v1202
    %v1218 = vunpack.c.l.b16 %v1203
    %v1219 = vunpack.c.l.b16 %v1204
    %v1220 = vpack.c.b16 %v1217, %v1216
    %v1221 = vpack.c.b16 %v1219, %v1218
    %v1225 = vsel %vm50, %v1200, 0
    %1227 = vmatprep.subr.bf16.mxu0 0
    %1228 = vmatpush1.bf16.msra.mxu0 %v1220
    %1229 = vmatprep.subr.bf16.mxu0 0
    %1230 = vmatpush1.bf16.msra.mxu0 %v1221
    %1231 = vmatprep.subr.bf16.mxu0 0
    %1232 = vmatpush1.bf16.msra.mxu0 0
    %1233 = vmatprep.subr.bf16.mxu0 0
    %1234 = vmatpush1.bf16.msra.mxu0 0
    %1235 = vmatprep.subr.bf16.mxu0 0
    %1236 = vmatpush1.bf16.msra.mxu0 0
    %1237 = vmatprep.subr.bf16.mxu0 0
    %1238 = vmatpush1.bf16.msra.mxu0 0
    %1239 = vmatprep.subr.bf16.mxu0 0
    %1240 = vmatpush1.bf16.msra.mxu0 0
    %1241 = vmatprep.subr.bf16.mxu0 0
    %1242 = vmatpush1.bf16.msra.mxu0 0
    %1243 = vmatprep.subr.bf16.mxu0 0
    %1244 = vmatpush1.bf16.msra.mxu0 0
    %1245 = vmatprep.subr.bf16.mxu0 0
    %1246 = vmatpush1.bf16.msra.mxu0 0
    %1247 = vmatprep.subr.bf16.mxu0 0
    %1248 = vmatpush1.bf16.msra.mxu0 0
    %1249 = vmatprep.subr.bf16.mxu0 0
    %1250 = vmatpush1.bf16.msra.mxu0 0
    %1251 = vmatprep.subr.bf16.mxu0 0
    %1252 = vmatpush1.bf16.msra.mxu0 0
    %1253 = vmatprep.subr.bf16.mxu0 0
    %1254 = vmatpush1.bf16.msra.mxu0 0
    %1255 = vmatprep.subr.bf16.mxu0 0
    %1256 = vmatpush1.bf16.msra.mxu0 0
    %1257 = vmatprep.subr.bf16.mxu0 0
    %1258 = vmatpush1.bf16.msra.mxu0 0
    %1259 = vmatprep.mubr.bf16.mxu0 0
    %1260 = vmatmul.mubr.bf16.gmra.mrb[0].mxu0 %v1225
    %v1261 = vpop.f32.mrb[0].mxu0
    %v1262 = vadd.f32 %v1210, %v1261
    %v1263 = vpop.f32.mrb[0].mxu0
    %v1264 = vpop.f32.mrb[0].mxu0
    %v1265 = vadd.f32 %v1210, %v1264
    %v1266 = vpop.f32.mrb[0].mxu0
    %1267 = vdwg.mxu0
    %v1268 = vmul.f32 %v1262, 0.5
    %v1269 = vmul.f32 %v1265, 0.5
    %v1270 = vmul.f32 %v1262, 0.044715
    %v1271 = vmul.f32 %v1265, 0.044715
    %v1272 = vmul.f32 %v1270, %v1262
    %v1273 = vmul.f32 %v1271, %v1265
    %v1274 = vmul.f32 %v1272, %v1262
    %v1275 = vmul.f32 %v1273, %v1265
    %v1276 = vadd.f32 %v1262, %v1274
    %v1277 = vadd.f32 %v1265, %v1275
    %v1278 = vmul.f32 %v1276, 0.7978846
    %v1279 = vmul.f32 %v1277, 0.7978846
    %v1280 = vtanh.pop %v1278
    %v1281 = vtanh.pop %v1279
    %v1282 = vadd.f32 %v1280, 1.0
    %v1283 = vadd.f32 %v1281, 1.0
    %v1284 = vmul.f32 %v1268, %v1282
    %v1285 = vmul.f32 %v1269, %v1283
    %v1286 = vpack.c.bf16 %v1285, %v1284
    %v1287 = vld [vmem:[%s11] sm:$0xf]
    %v1288 = vld [vmem:[%s11 + $0x4] sm:$0xf]
    %v1289 = vld [vmem:[%s11 + $0x8] sm:$0xf]
    %v1290 = vld [vmem:[%s11 + $0xc] sm:$0xf]
    %v1291 = vld [vmem:[%s11 + $0x10] sm:$0xf]
    %v1292 = vld [vmem:[%s11 + $0x14] sm:$0xf]
    %v1293 = vld [vmem:[%s11 + $0x18] sm:$0xf]
    %v1294 = vld [vmem:[%s11 + $0x1c] sm:$0xf]
    %v1295 = vld [vmem:[%s11 + $0x20] sm:$0xf]
    %v1296 = vld [vmem:[%s11 + $0x24] sm:$0xf]
    %v1297 = vld [vmem:[%s11 + $0x28] sm:$0xf]
    %v1298 = vld [vmem:[%s11 + $0x2c] sm:$0xf]
    %v1299 = vld [vmem:[%s11 + $0x30] sm:$0xf]
    %v1300 = vld [vmem:[%s11 + $0x34] sm:$0xf]
    %v1301 = vld [vmem:[%s11 + $0x38] sm:$0xf]
    %v1302 = vld [vmem:[%s11 + $0x3c] sm:$0xf]
    %v1303 = vld [vmem:[%s12] sm:$0x1]
    %v1305 = vlaneseq
    %v1306 = vshrl.u32 %v1305, 7
    %v1307 = vsub.s32 0, %v1306
    %v1308 = vrot.slane %v1303, %v1307
    %v1326 = vunpack.c.l.b16 %v1287
    %v1327 = vunpack.c.l.b16 %v1288
    %v1328 = vunpack.c.l.b16 %v1289
    %v1329 = vunpack.c.l.b16 %v1290
    %v1330 = vunpack.c.l.b16 %v1291
    %v1331 = vunpack.c.l.b16 %v1292
    %v1332 = vunpack.c.l.b16 %v1293
    %v1333 = vunpack.c.l.b16 %v1294
    %v1334 = vunpack.c.l.b16 %v1295
    %v1335 = vunpack.c.l.b16 %v1296
    %v1336 = vunpack.c.l.b16 %v1297
    %v1337 = vunpack.c.l.b16 %v1298
    %v1338 = vunpack.c.l.b16 %v1299
    %v1339 = vunpack.c.l.b16 %v1300
    %v1340 = vunpack.c.l.b16 %v1301
    %v1341 = vunpack.c.l.b16 %v1302
    %v1342 = vpack.c.b16 %v1327, %v1326
    %v1343 = vpack.c.b16 %v1329, %v1328
    %v1344 = vpack.c.b16 %v1331, %v1330
    %v1345 = vpack.c.b16 %v1333, %v1332
    %v1346 = vpack.c.b16 %v1335, %v1334
    %v1347 = vpack.c.b16 %v1337, %v1336
    %v1348 = vpack.c.b16 %v1339, %v1338
    %v1349 = vpack.c.b16 %v1341, %v1340
    %1358 = vmatprep.subr.bf16.mxu0 0
    %1359 = vmatpush1.bf16.msra.mxu0 %v1342
    %1360 = vmatprep.subr.bf16.mxu0 0
    %1361 = vmatpush1.bf16.msra.mxu0 %v1343
    %1362 = vmatprep.subr.bf16.mxu0 0
    %1363 = vmatpush1.bf16.msra.mxu0 %v1344
    %1364 = vmatprep.subr.bf16.mxu0 0
    %1365 = vmatpush1.bf16.msra.mxu0 %v1345
    %1366 = vmatprep.subr.bf16.mxu0 0
    %1367 = vmatpush1.bf16.msra.mxu0 %v1346
    %1368 = vmatprep.subr.bf16.mxu0 0
    %1369 = vmatpush1.bf16.msra.mxu0 %v1347
    %1370 = vmatprep.subr.bf16.mxu0 0
    %1371 = vmatpush1.bf16.msra.mxu0 %v1348
    %1372 = vmatprep.subr.bf16.mxu0 0
    %1373 = vmatpush1.bf16.msra.mxu0 %v1349
    %1374 = vmatprep.subr.bf16.mxu0 0
    %1375 = vmatpush1.bf16.msra.mxu0 0
    %1376 = vmatprep.subr.bf16.mxu0 0
    %1377 = vmatpush1.bf16.msra.mxu0 0
    %1378 = vmatprep.subr.bf16.mxu0 0
    %1379 = vmatpush1.bf16.msra.mxu0 0
    %1380 = vmatprep.subr.bf16.mxu0 0
    %1381 = vmatpush1.bf16.msra.mxu0 0
    %1382 = vmatprep.subr.bf16.mxu0 0
    %1383 = vmatpush1.bf16.msra.mxu0 0
    %1384 = vmatprep.subr.bf16.mxu0 0
    %1385 = vmatpush1.bf16.msra.mxu0 0
    %1386 = vmatprep.subr.bf16.mxu0 0
    %1387 = vmatpush1.bf16.msra.mxu0 0
    %1388 = vmatprep.subr.bf16.mxu0 0
    %1389 = vmatpush1.bf16.msra.mxu0 0
    %1390 = vmatprep.mubr.bf16.mxu0 0
    %1391 = vmatmul.mubr.bf16.gmra.mrb[0].mxu0 %v1286
    %v1392 = vpop.f32.mrb[0].mxu0
    %v1393 = vadd.f32 %v1308, %v1392
    %v1394 = vpop.f32.mrb[0].mxu0
    %v1395 = vpop.f32.mrb[0].mxu0
    %v1396 = vadd.f32 %v1308, %v1395
    %v1397 = vpop.f32.mrb[0].mxu0
    %1398 = vdwg.mxu0
    %v1399 = vadd.f32 %v1154, %v1393
    %v1400 = vadd.f32 %v1155, %v1396
    %1401 = vst.msk [vmem:[#allocation2] sm:$0xff] %vm50, %v1399
    %1402 = vst.msk [vmem:[#allocation2 + $0x8] sm:$0xff] %vm50, %v1400
    // Predicated region
    $region54: #{tpu_custom_call.1} parent=1 // pred_check
      _
    $region55: #{tpu_custom_call.1} parent=1 // pred_check_branch
      %1404 = sbr.rel (0) target = $region57
    $region56: #{tpu_custom_call.1} parent=1 // pred_region
      %s1406 = ssub.s32 256, 256
      %1407 = vsyncadd [#allocation3], %s1406
      %s1408 = sshll.u32 [#allocation2], 4
      %s1409 = int_to_ptr.vmem [resolvable:$true] %s1408
      %1414 = dma.vmem_to_hbm [thread:$0]  %s1409, 256, %s13, [#allocation3], 128, 128, 8
    $region57: #{tpu_custom_call.1} parent=1 // pred_fallthru
      _
    // Predicated region
    $region58: #{tpu_custom_call.1} parent=1 // pred_check
      _
    $region59: #{tpu_custom_call.1} parent=1 // pred_check_branch
      %1416 = sbr.rel (0) target = $region61
    $region60: #{tpu_custom_call.1} parent=1 // pred_region
      %1417 = dma.done [#allocation3], 256
    $region61: #{tpu_custom_call.1} parent=1 // pred_fallthru
      _
    %1418 = vsyncpa [#allocation3], 1

</llo_original>
